<compile_context>
chip_gen: v7x
topology: tpu7x:2x2x1
jax: 0.10.0
libtpu: 0.0.40
codegen_flags: <defaults>
</compile_context>

<pallas_src>
import functools

import numpy as np
import jax
import jax.numpy as jnp
from jax import lax
from jax.experimental import pallas as pl
from jax.experimental.pallas import tpu as pltpu

LRELU_SLOPE = 0.1


def get_padding(kernel_size, dilation=1):
    return int((kernel_size * dilation - dilation) / 2)


def _lrelu(x):
    return jnp.where(x > 0, x, LRELU_SLOPE * x)


# --------------------------- fused Pallas kernel -----------------------------

def _conv_band(x, wb_ref, bb_ref, conv_idx, xpad_ref, *, H, WC, KH, dh, ph_max):
    """One 'same'-padded (in height) conv in the lane-dense (H, W*C) layout.

    x        : (H, WC) f32 activation (pre-leaky-relu).
    wb_ref   : (n_conv, KH, WC, WC) banded weights (width taps + channels folded).
    bb_ref   : (n_conv, 1, WC) banded biases.
    xpad_ref : VMEM scratch (>= H + 2*ph_max rows, WC) whose top/bottom halos are
               already zero; only the interior [ph_max, ph_max+H) is (re)written.
    Returns (H, WC) f32 = conv(leaky_relu(x)) + bias.
    """
    # Interior rows only; zero halos were written once at kernel entry.
    xpad_ref[ph_max:ph_max + H, :] = _lrelu(x)

    ph = get_padding(KH, dh)          # this conv's nominal height padding
    off = ph_max - ph                 # static shift into the unified padded buffer

    # KH (=3) full-width (H,128)x(128,128) MXU GEMMs, f32 accumulation.
    acc = jnp.dot(xpad_ref[off:off + H, :], wb_ref[conv_idx, 0],
                  preferred_element_type=jnp.float32)
    for i in range(1, KH):
        s = off + i * dh
        acc = acc + jnp.dot(xpad_ref[s:s + H, :], wb_ref[conv_idx, i],
                            preferred_element_type=jnp.float32)
    return acc + bb_ref[conv_idx]     # (1, WC) broadcast


def resblock_kernel(x_ref, wb_ref, bb_ref, o_ref, xpad_ref,
                    *, H, WC, KH, dils, ph_max):
    # Zero the top/bottom halos of the padding scratch ONCE; all six convs share
    # the same halo (they only overwrite the interior rows).
    hp_alloc = xpad_ref.shape[0]
    xpad_ref[0:ph_max, :] = jnp.zeros((ph_max, WC), jnp.float32)
    xpad_ref[ph_max + H:, :] = jnp.zeros((hp_alloc - ph_max - H, WC), jnp.float32)

    x = x_ref[0].astype(jnp.float32)  # (H, WC)
    for p, d in enumerate(dils):
        xt = _conv_band(x, wb_ref, bb_ref, 2 * p, xpad_ref,
                        H=H, WC=WC, KH=KH, dh=d, ph_max=ph_max)
        xt = _conv_band(xt, wb_ref, bb_ref, 2 * p + 1, xpad_ref,
                        H=H, WC=WC, KH=KH, dh=1, ph_max=ph_max)
        x = x + xt
    o_ref[0] = x.astype(o_ref.dtype)


def resblock_forward_pallas(x_nhwc, prepared):
    """x_nhwc: (N, H, W, C). Returns (N, H, W, C)."""
    wb, bb, dils, KH = prepared
    N, H, W, C = x_nhwc.shape
    WC = W * C
    n_conv = wb.shape[0]
    ph_max = get_padding(KH, max(dils))
    hp_alloc = ((H + 2 * ph_max + 7) // 8) * 8   # round scratch rows to sublane tile

    x2 = x_nhwc.reshape(N, H, WC)  # lane-dense: last dim = W*C (=128 here)
    kern = functools.partial(resblock_kernel, H=H, WC=WC, KH=KH,
                             dils=dils, ph_max=ph_max)

    out = pl.pallas_call(
        kern,
        out_shape=jax.ShapeDtypeStruct((N, H, WC), x_nhwc.dtype),
        grid_spec=pltpu.PrefetchScalarGridSpec(
            num_scalar_prefetch=0,
            grid=(N,),
            in_specs=[
                pl.BlockSpec((1, H, WC), lambda n: (n, 0, 0)),               # x
                pl.BlockSpec((n_conv, KH, WC, WC), lambda n: (0, 0, 0, 0)),  # weights
                pl.BlockSpec((n_conv, 1, WC), lambda n: (0, 0, 0)),          # biases
            ],
            out_specs=pl.BlockSpec((1, H, WC), lambda n: (n, 0, 0)),
            scratch_shapes=[pltpu.VMEM((hp_alloc, WC), jnp.float32)],
        ),
        compiler_params=pltpu.CompilerParams(
            dimension_semantics=("parallel",)),  # batch split -> both TCs on v7x
    )(x2, wb, bb)
    return out.reshape(N, H, W, C)


# ------------------- parameter construction & preprocessing ------------------

def make_conv_params(key, channels, kh, kw):
    """Mimics weight_norm(nn.Conv2d) + init_weights (std=0.01).

    weight_norm: w = g * v / ||v||, g initialized to ||v|| so effective w == v.
    Returns effective weight in HWIO layout plus bias."""
    kv, kb = jax.random.split(key)
    v = jax.random.normal(kv, (channels, channels, kh, kw), jnp.float32) * 0.01  # OIHW
    norm = jnp.sqrt(jnp.sum(v * v, axis=(1, 2, 3), keepdims=True))
    g = norm
    w = g * v / norm
    b = (jax.random.uniform(kb, (channels,), jnp.float32) - 0.5) * 0.1
    w_hwio = jnp.transpose(w, (2, 3, 1, 0))  # OIHW -> HWIO
    return w_hwio, b


def make_resblock_params(key, channels, kernel_size, dilation):
    params = []
    keys = jax.random.split(key, 6)
    kws = [3, 5, 5]  # width kernels of the three conv pairs (spec: (k,3),(k,5),(k,5))
    for idx in range(3):
        w1, b1 = make_conv_params(keys[2 * idx], channels, kernel_size, kws[idx])
        w2, b2 = make_conv_params(keys[2 * idx + 1], channels, kernel_size, kws[idx])
        params.append((w1, b1, dilation[idx], w2, b2))
    return params


def _banded_width_weight(w_hwio, w_spatial):
    """Fold width taps + channel contraction into (KH, W*Cin, W*Cout).

    Wband[i][wi*Cin+ci, wo*Cout+co] = w_hwio[i, j, ci, co] where wi = wo + j - pw,
    for j in [0, KW); out-of-range taps are absent (== zero-padding in width)."""
    w = np.asarray(w_hwio, np.float32)
    KH, KW, Cin, Cout = w.shape
    pw = get_padding(KW, 1)
    out = np.zeros((KH, w_spatial * Cin, w_spatial * Cout), np.float32)
    for wo in range(w_spatial):
        for j in range(KW):
            wi = wo + j - pw
            if 0 <= wi < w_spatial:
                out[:, wi * Cin:(wi + 1) * Cin, wo * Cout:(wo + 1) * Cout] = w[:, j]
    return out


def prepare_resblock_params(params, w_spatial):
    """One-time host-side prep: build banded weights/biases, stack all 6 convs."""
    wbands, bbands, dils = [], [], []
    for (w1, b1, d1, w2, b2) in params:
        wbands.append(_banded_width_weight(w1, w_spatial))
        bbands.append(np.tile(np.asarray(b1, np.float32), w_spatial)[None, :])
        wbands.append(_banded_width_weight(w2, w_spatial))
        bbands.append(np.tile(np.asarray(b2, np.float32), w_spatial)[None, :])
        dils.append(int(d1))
    KH = int(params[0][0].shape[0])
    return (jnp.asarray(np.stack(wbands)),   # (6, KH, W*C, W*C)
            jnp.asarray(np.stack(bbands)),   # (6, 1, W*C)
            tuple(dils), KH)


# --------------------------- pure-JAX reference -------------------------------

def _conv_ref(x, w, b, dil_h):
    KH, KW = w.shape[0], w.shape[1]
    ph = get_padding(KH, dil_h)
    pw = get_padding(KW, 1)
    y = lax.conv_general_dilated(
        x, w, window_strides=(1, 1),
        padding=[(ph, ph), (pw, pw)],
        rhs_dilation=(dil_h, 1),
        dimension_numbers=("NHWC", "HWIO", "NHWC"),
        precision=lax.Precision.HIGHEST)
    return y + b.reshape(1, 1, 1, -1)


def resblock_forward_ref(x_nhwc, params):
    x = x_nhwc
    for (w1, b1, d1, w2, b2) in params:
        xt = _conv_ref(_lrelu(x), w1, b1, d1)
        xt = _conv_ref(_lrelu(xt), w2, b2, 1)
        x = xt + x
    return x


if __name__ == "__main__":
    key = jax.random.PRNGKey(0)
    k_param, k_x = jax.random.split(key)

    channels, kernel_size, dilation = 8, 3, (1, 3, 5)
    N, H, W = 2, 16, 16          # W * channels == 128 -> fully lane-dense layout

    params = make_resblock_params(k_param, channels, kernel_size, dilation)
    prepared = prepare_resblock_params(params, W)

    # PyTorch-style NCHW input, transposed once at the boundary to NHWC.
    x_nchw = jax.random.normal(k_x, (N, channels, H, W), jnp.float32)
    x_nhwc = jnp.transpose(x_nchw, (0, 2, 3, 1))

    out = resblock_forward_pallas(x_nhwc, prepared)
    out = jax.block_until_ready(out)

    ref = resblock_forward_ref(x_nhwc, params)
    assert out.shape == (N, H, W, channels)
    assert jnp.allclose(out, ref, atol=2e-3, rtol=2e-3), "mismatch vs reference"

    print("KERNEL_OK")
</pallas_src>

<mosaic_0001>
module attributes {stable_mosaic.version = 11 : i64} {
  func.func @resblock_kernel(%arg0: i32, %arg1: memref<1x16x128xf32, #tpu.memory_space<vmem>>, %arg2: memref<6x3x128x128xf32, #tpu.memory_space<vmem>>, %arg3: memref<6x1x128xf32, #tpu.memory_space<vmem>>, %arg4: memref<1x16x128xf32, #tpu.memory_space<vmem>>, %arg5: memref<32x128xf32, #tpu.memory_space<vmem>>) attributes {dimension_semantics = [#tpu.dimension_semantics<parallel>], iteration_bounds = array<i64: 2>, scalar_prefetch = 0 : i64, scratch_operands = 1 : i64, tpu.core_type = #tpu.core_type<tc>, window_params = [{transform_indices = @transform_0, window_bounds = array<i64: 1, 16, 128>}, {pipeline_mode = #tpu.pipeline_mode<synchronous>, transform_indices = @transform_1, window_bounds = array<i64: 6, 3, 128, 128>}, {pipeline_mode = #tpu.pipeline_mode<synchronous>, transform_indices = @transform_2, window_bounds = array<i64: 6, 1, 128>}, {transform_indices = @transform_3, window_bounds = array<i64: 1, 16, 128>}]} {
    %cst = arith.constant 0.000000e+00 : f32
    %0 = vector.broadcast %cst : f32 to vector<5x128xf32>
    %c0 = arith.constant 0 : index
    %c0_0 = arith.constant 0 : index
    %1 = vector.load %arg5[%c0, %c0_0] : memref<32x128xf32, #tpu.memory_space<vmem>>, vector<5x128xf32>
    tpu.vector_store %arg5[%c0, %c0_0], %0 {strides = array<i32>} : memref<32x128xf32, #tpu.memory_space<vmem>>, vector<5x128xf32>,
    %cst_1 = arith.constant 0.000000e+00 : f32
    %2 = vector.broadcast %cst_1 : f32 to vector<11x128xf32>
    %c21 = arith.constant 21 : index
    %c0_2 = arith.constant 0 : index
    %3 = vector.load %arg5[%c21, %c0_2] : memref<32x128xf32, #tpu.memory_space<vmem>>, vector<11x128xf32>
    tpu.vector_store %arg5[%c21, %c0_2], %2 {strides = array<i32>} : memref<32x128xf32, #tpu.memory_space<vmem>>, vector<11x128xf32>,
    %c0_3 = arith.constant 0 : index
    %c0_4 = arith.constant 0 : index
    %c0_5 = arith.constant 0 : index
    %4 = vector.load %arg1[%c0_3, %c0_4, %c0_5] : memref<1x16x128xf32, #tpu.memory_space<vmem>>, vector<1x16x128xf32>
    %5 = vector.shape_cast %4 : vector<1x16x128xf32> to vector<16x128xf32>
    %cst_6 = arith.constant 0.000000e+00 : f32
    %6 = vector.broadcast %cst_6 : f32 to vector<16x128xf32>
    %7 = arith.cmpf ogt, %5, %6 : vector<16x128xf32>
    %cst_7 = arith.constant 1.000000e-01 : f32
    %8 = vector.broadcast %cst_7 : f32 to vector<16x128xf32>
    %9 = arith.mulf %8, %5 : vector<16x128xf32>
    %10 = arith.select %7, %5, %9 : vector<16x128xi1>, vector<16x128xf32>
    %c5 = arith.constant 5 : index
    %c0_8 = arith.constant 0 : index
    %11 = vector.load %arg5[%c5, %c0_8] : memref<32x128xf32, #tpu.memory_space<vmem>>, vector<16x128xf32>
    tpu.vector_store %arg5[%c5, %c0_8], %10 {strides = array<i32>} : memref<32x128xf32, #tpu.memory_space<vmem>>, vector<16x128xf32>,
    %c4 = arith.constant 4 : index
    %c0_9 = arith.constant 0 : index
    %12 = vector.load %arg5[%c4, %c0_9] : memref<32x128xf32, #tpu.memory_space<vmem>>, vector<16x128xf32>
    %c0_10 = arith.constant 0 : index
    %c0_11 = arith.constant 0 : index
    %c0_12 = arith.constant 0 : index
    %c0_13 = arith.constant 0 : index
    %13 = vector.load %arg2[%c0_10, %c0_11, %c0_12, %c0_13] : memref<6x3x128x128xf32, #tpu.memory_space<vmem>>, vector<1x1x128x128xf32>
    %14 = vector.shape_cast %13 : vector<1x1x128x128xf32> to vector<128x128xf32>
    %cst_14 = arith.constant dense<0.000000e+00> : vector<16x128xf32>
    %15 = tpu.matmul %12, %14, %cst_14 {dimension_numbers = #tpu.dot_dimension_numbers<[1], [0], [0], [1], [0, 0, 1, 1], [], []>} : vector<16x128xf32>, vector<128x128xf32>, vector<16x128xf32> -> vector<16x128xf32>
    %c5_15 = arith.constant 5 : index
    %c0_16 = arith.constant 0 : index
    %16 = vector.load %arg5[%c5_15, %c0_16] : memref<32x128xf32, #tpu.memory_space<vmem>>, vector<16x128xf32>
    %c0_17 = arith.constant 0 : index
    %c1 = arith.constant 1 : index
    %c0_18 = arith.constant 0 : index
    %c0_19 = arith.constant 0 : index
    %17 = vector.load %arg2[%c0_17, %c1, %c0_18, %c0_19] : memref<6x3x128x128xf32, #tpu.memory_space<vmem>>, vector<1x1x128x128xf32>
    %18 = vector.shape_cast %17 : vector<1x1x128x128xf32> to vector<128x128xf32>
    %cst_20 = arith.constant dense<0.000000e+00> : vector<16x128xf32>
    %19 = tpu.matmul %16, %18, %cst_20 {dimension_numbers = #tpu.dot_dimension_numbers<[1], [0], [0], [1], [0, 0, 1, 1], [], []>} : vector<16x128xf32>, vector<128x128xf32>, vector<16x128xf32> -> vector<16x128xf32>
    %20 = arith.addf %15, %19 : vector<16x128xf32>
    %c6 = arith.constant 6 : index
    %c0_21 = arith.constant 0 : index
    %21 = vector.load %arg5[%c6, %c0_21] : memref<32x128xf32, #tpu.memory_space<vmem>>, vector<16x128xf32>
    %c0_22 = arith.constant 0 : index
    %c2 = arith.constant 2 : index
    %c0_23 = arith.constant 0 : index
    %c0_24 = arith.constant 0 : index
    %22 = vector.load %arg2[%c0_22, %c2, %c0_23, %c0_24] : memref<6x3x128x128xf32, #tpu.memory_space<vmem>>, vector<1x1x128x128xf32>
    %23 = vector.shape_cast %22 : vector<1x1x128x128xf32> to vector<128x128xf32>
    %cst_25 = arith.constant dense<0.000000e+00> : vector<16x128xf32>
    %24 = tpu.matmul %21, %23, %cst_25 {dimension_numbers = #tpu.dot_dimension_numbers<[1], [0], [0], [1], [0, 0, 1, 1], [], []>} : vector<16x128xf32>, vector<128x128xf32>, vector<16x128xf32> -> vector<16x128xf32>
    %25 = arith.addf %20, %24 : vector<16x128xf32>
    %c0_26 = arith.constant 0 : index
    %c0_27 = arith.constant 0 : index
    %c0_28 = arith.constant 0 : index
    %26 = vector.load %arg3[%c0_26, %c0_27, %c0_28] : memref<6x1x128xf32, #tpu.memory_space<vmem>>, vector<1x1x128xf32>
    %27 = vector.shape_cast %26 : vector<1x1x128xf32> to vector<1x128xf32>
    %28 = vector.broadcast %27 : vector<1x128xf32> to vector<16x128xf32>
    %29 = arith.addf %25, %28 : vector<16x128xf32>
    %cst_29 = arith.constant 0.000000e+00 : f32
    %30 = vector.broadcast %cst_29 : f32 to vector<16x128xf32>
    %31 = arith.cmpf ogt, %29, %30 : vector<16x128xf32>
    %cst_30 = arith.constant 1.000000e-01 : f32
    %32 = vector.broadcast %cst_30 : f32 to vector<16x128xf32>
    %33 = arith.mulf %32, %29 : vector<16x128xf32>
    %34 = arith.select %31, %29, %33 : vector<16x128xi1>, vector<16x128xf32>
    %c5_31 = arith.constant 5 : index
    %c0_32 = arith.constant 0 : index
    %35 = vector.load %arg5[%c5_31, %c0_32] : memref<32x128xf32, #tpu.memory_space<vmem>>, vector<16x128xf32>
    tpu.vector_store %arg5[%c5_31, %c0_32], %34 {strides = array<i32>} : memref<32x128xf32, #tpu.memory_space<vmem>>, vector<16x128xf32>,
    %c4_33 = arith.constant 4 : index
    %c0_34 = arith.constant 0 : index
    %36 = vector.load %arg5[%c4_33, %c0_34] : memref<32x128xf32, #tpu.memory_space<vmem>>, vector<16x128xf32>
    %c1_35 = arith.constant 1 : index
    %c0_36 = arith.constant 0 : index
    %c0_37 = arith.constant 0 : index
    %c0_38 = arith.constant 0 : index
    %37 = vector.load %arg2[%c1_35, %c0_36, %c0_37, %c0_38] : memref<6x3x128x128xf32, #tpu.memory_space<vmem>>, vector<1x1x128x128xf32>
    %38 = vector.shape_cast %37 : vector<1x1x128x128xf32> to vector<128x128xf32>
    %cst_39 = arith.constant dense<0.000000e+00> : vector<16x128xf32>
    %39 = tpu.matmul %36, %38, %cst_39 {dimension_numbers = #tpu.dot_dimension_numbers<[1], [0], [0], [1], [0, 0, 1, 1], [], []>} : vector<16x128xf32>, vector<128x128xf32>, vector<16x128xf32> -> vector<16x128xf32>
    %c5_40 = arith.constant 5 : index
    %c0_41 = arith.constant 0 : index
    %40 = vector.load %arg5[%c5_40, %c0_41] : memref<32x128xf32, #tpu.memory_space<vmem>>, vector<16x128xf32>
    %c1_42 = arith.constant 1 : index
    %c1_43 = arith.constant 1 : index
    %c0_44 = arith.constant 0 : index
    %c0_45 = arith.constant 0 : index
    %41 = vector.load %arg2[%c1_42, %c1_43, %c0_44, %c0_45] : memref<6x3x128x128xf32, #tpu.memory_space<vmem>>, vector<1x1x128x128xf32>
    %42 = vector.shape_cast %41 : vector<1x1x128x128xf32> to vector<128x128xf32>
    %cst_46 = arith.constant dense<0.000000e+00> : vector<16x128xf32>
    %43 = tpu.matmul %40, %42, %cst_46 {dimension_numbers = #tpu.dot_dimension_numbers<[1], [0], [0], [1], [0, 0, 1, 1], [], []>} : vector<16x128xf32>, vector<128x128xf32>, vector<16x128xf32> -> vector<16x128xf32>
    %44 = arith.addf %39, %43 : vector<16x128xf32>
    %c6_47 = arith.constant 6 : index
    %c0_48 = arith.constant 0 : index
    %45 = vector.load %arg5[%c6_47, %c0_48] : memref<32x128xf32, #tpu.memory_space<vmem>>, vector<16x128xf32>
    %c1_49 = arith.constant 1 : index
    %c2_50 = arith.constant 2 : index
    %c0_51 = arith.constant 0 : index
    %c0_52 = arith.constant 0 : index
    %46 = vector.load %arg2[%c1_49, %c2_50, %c0_51, %c0_52] : memref<6x3x128x128xf32, #tpu.memory_space<vmem>>, vector<1x1x128x128xf32>
    %47 = vector.shape_cast %46 : vector<1x1x128x128xf32> to vector<128x128xf32>
    %cst_53 = arith.constant dense<0.000000e+00> : vector<16x128xf32>
    %48 = tpu.matmul %45, %47, %cst_53 {dimension_numbers = #tpu.dot_dimension_numbers<[1], [0], [0], [1], [0, 0, 1, 1], [], []>} : vector<16x128xf32>, vector<128x128xf32>, vector<16x128xf32> -> vector<16x128xf32>
    %49 = arith.addf %44, %48 : vector<16x128xf32>
    %c1_54 = arith.constant 1 : index
    %c0_55 = arith.constant 0 : index
    %c0_56 = arith.constant 0 : index
    %50 = vector.load %arg3[%c1_54, %c0_55, %c0_56] : memref<6x1x128xf32, #tpu.memory_space<vmem>>, vector<1x1x128xf32>
    %51 = vector.shape_cast %50 : vector<1x1x128xf32> to vector<1x128xf32>
    %52 = vector.broadcast %51 : vector<1x128xf32> to vector<16x128xf32>
    %53 = arith.addf %49, %52 : vector<16x128xf32>
    %54 = arith.addf %5, %53 : vector<16x128xf32>
    %cst_57 = arith.constant 0.000000e+00 : f32
    %55 = vector.broadcast %cst_57 : f32 to vector<16x128xf32>
    %56 = arith.cmpf ogt, %54, %55 : vector<16x128xf32>
    %cst_58 = arith.constant 1.000000e-01 : f32
    %57 = vector.broadcast %cst_58 : f32 to vector<16x128xf32>
    %58 = arith.mulf %57, %54 : vector<16x128xf32>
    %59 = arith.select %56, %54, %58 : vector<16x128xi1>, vector<16x128xf32>
    %c5_59 = arith.constant 5 : index
    %c0_60 = arith.constant 0 : index
    %60 = vector.load %arg5[%c5_59, %c0_60] : memref<32x128xf32, #tpu.memory_space<vmem>>, vector<16x128xf32>
    tpu.vector_store %arg5[%c5_59, %c0_60], %59 {strides = array<i32>} : memref<32x128xf32, #tpu.memory_space<vmem>>, vector<16x128xf32>,
    %c2_61 = arith.constant 2 : index
    %c0_62 = arith.constant 0 : index
    %61 = vector.load %arg5[%c2_61, %c0_62] : memref<32x128xf32, #tpu.memory_space<vmem>>, vector<16x128xf32>
    %c2_63 = arith.constant 2 : index
    %c0_64 = arith.constant 0 : index
    %c0_65 = arith.constant 0 : index
    %c0_66 = arith.constant 0 : index
    %62 = vector.load %arg2[%c2_63, %c0_64, %c0_65, %c0_66] : memref<6x3x128x128xf32, #tpu.memory_space<vmem>>, vector<1x1x128x128xf32>
    %63 = vector.shape_cast %62 : vector<1x1x128x128xf32> to vector<128x128xf32>
    %cst_67 = arith.constant dense<0.000000e+00> : vector<16x128xf32>
    %64 = tpu.matmul %61, %63, %cst_67 {dimension_numbers = #tpu.dot_dimension_numbers<[1], [0], [0], [1], [0, 0, 1, 1], [], []>} : vector<16x128xf32>, vector<128x128xf32>, vector<16x128xf32> -> vector<16x128xf32>
    %c5_68 = arith.constant 5 : index
    %c0_69 = arith.constant 0 : index
    %65 = vector.load %arg5[%c5_68, %c0_69] : memref<32x128xf32, #tpu.memory_space<vmem>>, vector<16x128xf32>
    %c2_70 = arith.constant 2 : index
    %c1_71 = arith.constant 1 : index
    %c0_72 = arith.constant 0 : index
    %c0_73 = arith.constant 0 : index
    %66 = vector.load %arg2[%c2_70, %c1_71, %c0_72, %c0_73] : memref<6x3x128x128xf32, #tpu.memory_space<vmem>>, vector<1x1x128x128xf32>
    %67 = vector.shape_cast %66 : vector<1x1x128x128xf32> to vector<128x128xf32>
    %cst_74 = arith.constant dense<0.000000e+00> : vector<16x128xf32>
    %68 = tpu.matmul %65, %67, %cst_74 {dimension_numbers = #tpu.dot_dimension_numbers<[1], [0], [0], [1], [0, 0, 1, 1], [], []>} : vector<16x128xf32>, vector<128x128xf32>, vector<16x128xf32> -> vector<16x128xf32>
    %69 = arith.addf %64, %68 : vector<16x128xf32>
    %c8 = arith.constant 8 : index
    %c0_75 = arith.constant 0 : index
    %70 = vector.load %arg5[%c8, %c0_75] : memref<32x128xf32, #tpu.memory_space<vmem>>, vector<16x128xf32>
    %c2_76 = arith.constant 2 : index
    %c2_77 = arith.constant 2 : index
    %c0_78 = arith.constant 0 : index
    %c0_79 = arith.constant 0 : index
    %71 = vector.load %arg2[%c2_76, %c2_77, %c0_78, %c0_79] : memref<6x3x128x128xf32, #tpu.memory_space<vmem>>, vector<1x1x128x128xf32>
    %72 = vector.shape_cast %71 : vector<1x1x128x128xf32> to vector<128x128xf32>
    %cst_80 = arith.constant dense<0.000000e+00> : vector<16x128xf32>
    %73 = tpu.matmul %70, %72, %cst_80 {dimension_numbers = #tpu.dot_dimension_numbers<[1], [0], [0], [1], [0, 0, 1, 1], [], []>} : vector<16x128xf32>, vector<128x128xf32>, vector<16x128xf32> -> vector<16x128xf32>
    %74 = arith.addf %69, %73 : vector<16x128xf32>
    %c2_81 = arith.constant 2 : index
    %c0_82 = arith.constant 0 : index
    %c0_83 = arith.constant 0 : index
    %75 = vector.load %arg3[%c2_81, %c0_82, %c0_83] : memref<6x1x128xf32, #tpu.memory_space<vmem>>, vector<1x1x128xf32>
    %76 = vector.shape_cast %75 : vector<1x1x128xf32> to vector<1x128xf32>
    %77 = vector.broadcast %76 : vector<1x128xf32> to vector<16x128xf32>
    %78 = arith.addf %74, %77 : vector<16x128xf32>
    %cst_84 = arith.constant 0.000000e+00 : f32
    %79 = vector.broadcast %cst_84 : f32 to vector<16x128xf32>
    %80 = arith.cmpf ogt, %78, %79 : vector<16x128xf32>
    %cst_85 = arith.constant 1.000000e-01 : f32
    %81 = vector.broadcast %cst_85 : f32 to vector<16x128xf32>
    %82 = arith.mulf %81, %78 : vector<16x128xf32>
    %83 = arith.select %80, %78, %82 : vector<16x128xi1>, vector<16x128xf32>
    %c5_86 = arith.constant 5 : index
    %c0_87 = arith.constant 0 : index
    %84 = vector.load %arg5[%c5_86, %c0_87] : memref<32x128xf32, #tpu.memory_space<vmem>>, vector<16x128xf32>
    tpu.vector_store %arg5[%c5_86, %c0_87], %83 {strides = array<i32>} : memref<32x128xf32, #tpu.memory_space<vmem>>, vector<16x128xf32>,
    %c4_88 = arith.constant 4 : index
    %c0_89 = arith.constant 0 : index
    %85 = vector.load %arg5[%c4_88, %c0_89] : memref<32x128xf32, #tpu.memory_space<vmem>>, vector<16x128xf32>
    %c3 = arith.constant 3 : index
    %c0_90 = arith.constant 0 : index
    %c0_91 = arith.constant 0 : index
    %c0_92 = arith.constant 0 : index
    %86 = vector.load %arg2[%c3, %c0_90, %c0_91, %c0_92] : memref<6x3x128x128xf32, #tpu.memory_space<vmem>>, vector<1x1x128x128xf32>
    %87 = vector.shape_cast %86 : vector<1x1x128x128xf32> to vector<128x128xf32>
    %cst_93 = arith.constant dense<0.000000e+00> : vector<16x128xf32>
    %88 = tpu.matmul %85, %87, %cst_93 {dimension_numbers = #tpu.dot_dimension_numbers<[1], [0], [0], [1], [0, 0, 1, 1], [], []>} : vector<16x128xf32>, vector<128x128xf32>, vector<16x128xf32> -> vector<16x128xf32>
    %c5_94 = arith.constant 5 : index
    %c0_95 = arith.constant 0 : index
    %89 = vector.load %arg5[%c5_94, %c0_95] : memref<32x128xf32, #tpu.memory_space<vmem>>, vector<16x128xf32>
    %c3_96 = arith.constant 3 : index
    %c1_97 = arith.constant 1 : index
    %c0_98 = arith.constant 0 : index
    %c0_99 = arith.constant 0 : index
    %90 = vector.load %arg2[%c3_96, %c1_97, %c0_98, %c0_99] : memref<6x3x128x128xf32, #tpu.memory_space<vmem>>, vector<1x1x128x128xf32>
    %91 = vector.shape_cast %90 : vector<1x1x128x128xf32> to vector<128x128xf32>
    %cst_100 = arith.constant dense<0.000000e+00> : vector<16x128xf32>
    %92 = tpu.matmul %89, %91, %cst_100 {dimension_numbers = #tpu.dot_dimension_numbers<[1], [0], [0], [1], [0, 0, 1, 1], [], []>} : vector<16x128xf32>, vector<128x128xf32>, vector<16x128xf32> -> vector<16x128xf32>
    %93 = arith.addf %88, %92 : vector<16x128xf32>
    %c6_101 = arith.constant 6 : index
    %c0_102 = arith.constant 0 : index
    %94 = vector.load %arg5[%c6_101, %c0_102] : memref<32x128xf32, #tpu.memory_space<vmem>>, vector<16x128xf32>
    %c3_103 = arith.constant 3 : index
    %c2_104 = arith.constant 2 : index
    %c0_105 = arith.constant 0 : index
    %c0_106 = arith.constant 0 : index
    %95 = vector.load %arg2[%c3_103, %c2_104, %c0_105, %c0_106] : memref<6x3x128x128xf32, #tpu.memory_space<vmem>>, vector<1x1x128x128xf32>
    %96 = vector.shape_cast %95 : vector<1x1x128x128xf32> to vector<128x128xf32>
    %cst_107 = arith.constant dense<0.000000e+00> : vector<16x128xf32>
    %97 = tpu.matmul %94, %96, %cst_107 {dimension_numbers = #tpu.dot_dimension_numbers<[1], [0], [0], [1], [0, 0, 1, 1], [], []>} : vector<16x128xf32>, vector<128x128xf32>, vector<16x128xf32> -> vector<16x128xf32>
    %98 = arith.addf %93, %97 : vector<16x128xf32>
    %c3_108 = arith.constant 3 : index
    %c0_109 = arith.constant 0 : index
    %c0_110 = arith.constant 0 : index
    %99 = vector.load %arg3[%c3_108, %c0_109, %c0_110] : memref<6x1x128xf32, #tpu.memory_space<vmem>>, vector<1x1x128xf32>
    %100 = vector.shape_cast %99 : vector<1x1x128xf32> to vector<1x128xf32>
    %101 = vector.broadcast %100 : vector<1x128xf32> to vector<16x128xf32>
    %102 = arith.addf %98, %101 : vector<16x128xf32>
    %103 = arith.addf %54, %102 : vector<16x128xf32>
    %cst_111 = arith.constant 0.000000e+00 : f32
    %104 = vector.broadcast %cst_111 : f32 to vector<16x128xf32>
    %105 = arith.cmpf ogt, %103, %104 : vector<16x128xf32>
    %cst_112 = arith.constant 1.000000e-01 : f32
    %106 = vector.broadcast %cst_112 : f32 to vector<16x128xf32>
    %107 = arith.mulf %106, %103 : vector<16x128xf32>
    %108 = arith.select %105, %103, %107 : vector<16x128xi1>, vector<16x128xf32>
    %c5_113 = arith.constant 5 : index
    %c0_114 = arith.constant 0 : index
    %109 = vector.load %arg5[%c5_113, %c0_114] : memref<32x128xf32, #tpu.memory_space<vmem>>, vector<16x128xf32>
    tpu.vector_store %arg5[%c5_113, %c0_114], %108 {strides = array<i32>} : memref<32x128xf32, #tpu.memory_space<vmem>>, vector<16x128xf32>,
    %c0_115 = arith.constant 0 : index
    %c0_116 = arith.constant 0 : index
    %110 = vector.load %arg5[%c0_115, %c0_116] : memref<32x128xf32, #tpu.memory_space<vmem>>, vector<16x128xf32>
    %c4_117 = arith.constant 4 : index
    %c0_118 = arith.constant 0 : index
    %c0_119 = arith.constant 0 : index
    %c0_120 = arith.constant 0 : index
    %111 = vector.load %arg2[%c4_117, %c0_118, %c0_119, %c0_120] : memref<6x3x128x128xf32, #tpu.memory_space<vmem>>, vector<1x1x128x128xf32>
    %112 = vector.shape_cast %111 : vector<1x1x128x128xf32> to vector<128x128xf32>
    %cst_121 = arith.constant dense<0.000000e+00> : vector<16x128xf32>
    %113 = tpu.matmul %110, %112, %cst_121 {dimension_numbers = #tpu.dot_dimension_numbers<[1], [0], [0], [1], [0, 0, 1, 1], [], []>} : vector<16x128xf32>, vector<128x128xf32>, vector<16x128xf32> -> vector<16x128xf32>
    %c5_122 = arith.constant 5 : index
    %c0_123 = arith.constant 0 : index
    %114 = vector.load %arg5[%c5_122, %c0_123] : memref<32x128xf32, #tpu.memory_space<vmem>>, vector<16x128xf32>
    %c4_124 = arith.constant 4 : index
    %c1_125 = arith.constant 1 : index
    %c0_126 = arith.constant 0 : index
    %c0_127 = arith.constant 0 : index
    %115 = vector.load %arg2[%c4_124, %c1_125, %c0_126, %c0_127] : memref<6x3x128x128xf32, #tpu.memory_space<vmem>>, vector<1x1x128x128xf32>
    %116 = vector.shape_cast %115 : vector<1x1x128x128xf32> to vector<128x128xf32>
    %cst_128 = arith.constant dense<0.000000e+00> : vector<16x128xf32>
    %117 = tpu.matmul %114, %116, %cst_128 {dimension_numbers = #tpu.dot_dimension_numbers<[1], [0], [0], [1], [0, 0, 1, 1], [], []>} : vector<16x128xf32>, vector<128x128xf32>, vector<16x128xf32> -> vector<16x128xf32>
    %118 = arith.addf %113, %117 : vector<16x128xf32>
    %c10 = arith.constant 10 : index
    %c0_129 = arith.constant 0 : index
    %119 = vector.load %arg5[%c10, %c0_129] : memref<32x128xf32, #tpu.memory_space<vmem>>, vector<16x128xf32>
    %c4_130 = arith.constant 4 : index
    %c2_131 = arith.constant 2 : index
    %c0_132 = arith.constant 0 : index
    %c0_133 = arith.constant 0 : index
    %120 = vector.load %arg2[%c4_130, %c2_131, %c0_132, %c0_133] : memref<6x3x128x128xf32, #tpu.memory_space<vmem>>, vector<1x1x128x128xf32>
    %121 = vector.shape_cast %120 : vector<1x1x128x128xf32> to vector<128x128xf32>
    %cst_134 = arith.constant dense<0.000000e+00> : vector<16x128xf32>
    %122 = tpu.matmul %119, %121, %cst_134 {dimension_numbers = #tpu.dot_dimension_numbers<[1], [0], [0], [1], [0, 0, 1, 1], [], []>} : vector<16x128xf32>, vector<128x128xf32>, vector<16x128xf32> -> vector<16x128xf32>
    %123 = arith.addf %118, %122 : vector<16x128xf32>
    %c4_135 = arith.constant 4 : index
    %c0_136 = arith.constant 0 : index
    %c0_137 = arith.constant 0 : index
    %124 = vector.load %arg3[%c4_135, %c0_136, %c0_137] : memref<6x1x128xf32, #tpu.memory_space<vmem>>, vector<1x1x128xf32>
    %125 = vector.shape_cast %124 : vector<1x1x128xf32> to vector<1x128xf32>
    %126 = vector.broadcast %125 : vector<1x128xf32> to vector<16x128xf32>
    %127 = arith.addf %123, %126 : vector<16x128xf32>
    %cst_138 = arith.constant 0.000000e+00 : f32
    %128 = vector.broadcast %cst_138 : f32 to vector<16x128xf32>
    %129 = arith.cmpf ogt, %127, %128 : vector<16x128xf32>
    %cst_139 = arith.constant 1.000000e-01 : f32
    %130 = vector.broadcast %cst_139 : f32 to vector<16x128xf32>
    %131 = arith.mulf %130, %127 : vector<16x128xf32>
    %132 = arith.select %129, %127, %131 : vector<16x128xi1>, vector<16x128xf32>
    %c5_140 = arith.constant 5 : index
    %c0_141 = arith.constant 0 : index
    %133 = vector.load %arg5[%c5_140, %c0_141] : memref<32x128xf32, #tpu.memory_space<vmem>>, vector<16x128xf32>
    tpu.vector_store %arg5[%c5_140, %c0_141], %132 {strides = array<i32>} : memref<32x128xf32, #tpu.memory_space<vmem>>, vector<16x128xf32>,
    %c4_142 = arith.constant 4 : index
    %c0_143 = arith.constant 0 : index
    %134 = vector.load %arg5[%c4_142, %c0_143] : memref<32x128xf32, #tpu.memory_space<vmem>>, vector<16x128xf32>
    %c5_144 = arith.constant 5 : index
    %c0_145 = arith.constant 0 : index
    %c0_146 = arith.constant 0 : index
    %c0_147 = arith.constant 0 : index
    %135 = vector.load %arg2[%c5_144, %c0_145, %c0_146, %c0_147] : memref<6x3x128x128xf32, #tpu.memory_space<vmem>>, vector<1x1x128x128xf32>
    %136 = vector.shape_cast %135 : vector<1x1x128x128xf32> to vector<128x128xf32>
    %cst_148 = arith.constant dense<0.000000e+00> : vector<16x128xf32>
    %137 = tpu.matmul %134, %136, %cst_148 {dimension_numbers = #tpu.dot_dimension_numbers<[1], [0], [0], [1], [0, 0, 1, 1], [], []>} : vector<16x128xf32>, vector<128x128xf32>, vector<16x128xf32> -> vector<16x128xf32>
    %c5_149 = arith.constant 5 : index
    %c0_150 = arith.constant 0 : index
    %138 = vector.load %arg5[%c5_149, %c0_150] : memref<32x128xf32, #tpu.memory_space<vmem>>, vector<16x128xf32>
    %c5_151 = arith.constant 5 : index
    %c1_152 = arith.constant 1 : index
    %c0_153 = arith.constant 0 : index
    %c0_154 = arith.constant 0 : index
    %139 = vector.load %arg2[%c5_151, %c1_152, %c0_153, %c0_154] : memref<6x3x128x128xf32, #tpu.memory_space<vmem>>, vector<1x1x128x128xf32>
    %140 = vector.shape_cast %139 : vector<1x1x128x128xf32> to vector<128x128xf32>
    %cst_155 = arith.constant dense<0.000000e+00> : vector<16x128xf32>
    %141 = tpu.matmul %138, %140, %cst_155 {dimension_numbers = #tpu.dot_dimension_numbers<[1], [0], [0], [1], [0, 0, 1, 1], [], []>} : vector<16x128xf32>, vector<128x128xf32>, vector<16x128xf32> -> vector<16x128xf32>
    %142 = arith.addf %137, %141 : vector<16x128xf32>
    %c6_156 = arith.constant 6 : index
    %c0_157 = arith.constant 0 : index
    %143 = vector.load %arg5[%c6_156, %c0_157] : memref<32x128xf32, #tpu.memory_space<vmem>>, vector<16x128xf32>
    %c5_158 = arith.constant 5 : index
    %c2_159 = arith.constant 2 : index
    %c0_160 = arith.constant 0 : index
    %c0_161 = arith.constant 0 : index
    %144 = vector.load %arg2[%c5_158, %c2_159, %c0_160, %c0_161] : memref<6x3x128x128xf32, #tpu.memory_space<vmem>>, vector<1x1x128x128xf32>
    %145 = vector.shape_cast %144 : vector<1x1x128x128xf32> to vector<128x128xf32>
    %cst_162 = arith.constant dense<0.000000e+00> : vector<16x128xf32>
    %146 = tpu.matmul %143, %145, %cst_162 {dimension_numbers = #tpu.dot_dimension_numbers<[1], [0], [0], [1], [0, 0, 1, 1], [], []>} : vector<16x128xf32>, vector<128x128xf32>, vector<16x128xf32> -> vector<16x128xf32>
    %147 = arith.addf %142, %146 : vector<16x128xf32>
    %c5_163 = arith.constant 5 : index
    %c0_164 = arith.constant 0 : index
    %c0_165 = arith.constant 0 : index
    %148 = vector.load %arg3[%c5_163, %c0_164, %c0_165] : memref<6x1x128xf32, #tpu.memory_space<vmem>>, vector<1x1x128xf32>
    %149 = vector.shape_cast %148 : vector<1x1x128xf32> to vector<1x128xf32>
    %150 = vector.broadcast %149 : vector<1x128xf32> to vector<16x128xf32>
    %151 = arith.addf %147, %150 : vector<16x128xf32>
    %152 = arith.addf %103, %151 : vector<16x128xf32>
    %c0_166 = arith.constant 0 : index
    %c0_167 = arith.constant 0 : index
    %c0_168 = arith.constant 0 : index
    %153 = vector.load %arg4[%c0_166, %c0_167, %c0_168] : memref<1x16x128xf32, #tpu.memory_space<vmem>>, vector<1x16x128xf32>
    %154 = vector.shape_cast %153 : vector<1x16x128xf32> to vector<16x128xf32>
    %155 = vector.shape_cast %152 : vector<16x128xf32> to vector<1x16x128xf32>
    tpu.vector_store %arg4[%c0_166, %c0_167, %c0_168], %155 {strides = array<i32>} : memref<1x16x128xf32, #tpu.memory_space<vmem>>, vector<1x16x128xf32>,
    return
  }
  func.func @transform_0(%arg0: i32) -> (i32, i32, i32) {
    %c0_i32 = arith.constant 0 : i32
    %c0_i32_0 = arith.constant 0 : i32
    %c0_i32_1 = arith.constant 0 : i32
    return %arg0, %c0_i32, %c0_i32_0 : i32, i32, i32
  }
  func.func @transform_1(%arg0: i32) -> (i32, i32, i32, i32) {
    %c0_i32 = arith.constant 0 : i32
    %c0_i32_0 = arith.constant 0 : i32
    %c0_i32_1 = arith.constant 0 : i32
    %c0_i32_2 = arith.constant 0 : i32
    %c0_i32_3 = arith.constant 0 : i32
    return %c0_i32, %c0_i32_0, %c0_i32_1, %c0_i32_2 : i32, i32, i32, i32
  }
  func.func @transform_2(%arg0: i32) -> (i32, i32, i32) {
    %c0_i32 = arith.constant 0 : i32
    %c0_i32_0 = arith.constant 0 : i32
    %c0_i32_1 = arith.constant 0 : i32
    %c0_i32_2 = arith.constant 0 : i32
    return %c0_i32, %c0_i32_0, %c0_i32_1 : i32, i32, i32
  }
  func.func @transform_3(%arg0: i32) -> (i32, i32, i32) {
    %c0_i32 = arith.constant 0 : i32
    %c0_i32_0 = arith.constant 0 : i32
    %c0_i32_1 = arith.constant 0 : i32
    return %arg0, %c0_i32, %c0_i32_0 : i32, i32, i32
  }
}

</mosaic_0001>

<llo_original>
// kernel: tpu_custom_call.1
$region0: #{tpu_custom_call.1}
  #allocation0 [shape = 'u32[]', space=smem, size = 0x4, offset = 0x4, fixed_abs, tag = 'smem constant byte address 0x4 - core index']
  #allocation1 [shape = 'u32[144,128]{1,0:T(1,128)}', space=vmem, size = 0x12000, scoped, tag = 'internal scratch']
  #allocation2 [shape = 'f32[32,128]{1,0:T(8,128)}', space=vmem, size = 0x4000, scoped, tag = 'scratch operand']
  %s0 = inlined_call_operand.hbm [shape: f32[2,16,128], index: 0, kind: input, shape index: {}]
  %s1 = inlined_call_operand.hbm [shape: f32[6,3,128,128], index: 1, kind: input, shape index: {}]
  %s2 = inlined_call_operand.hbm [shape: f32[6,1,128], index: 2, kind: input, shape index: {}]
  %s3 = inlined_call_operand.hbm [shape: f32[2,16,128], index: 3, kind: output, shape index: {}]
  %s4 = sld [smem:[#allocation0]]
  $region57: #{tpu_custom_call.1} parent=0
    _
  %s6 = ssub.s32 1, %s4
  %s7 = scalar_select 0, %s6, %s4
  $region1: #{tpu_custom_call.1} parent=0
    #allocation3 [shape = 'u8[16384]{0}', space=vmem, size = 0x4000, scoped, tag = 'input window, operand 0']
    #allocation4 [shape = 's32[2]{0}', space=sflag, size = 0x8, scoped, tag = 'scoped memory for tpu_custom_call.1']
    #allocation5 [shape = 's32[2]{0}', space=sflag, size = 0x8, scoped, tag = 'scoped memory for tpu_custom_call.1']
    #allocation6 [shape = 'u8[1179648]{0}', space=vmem, size = 0x120000, scoped, tag = 'input window, operand 1, single buffered']
    #allocation7 [shape = 's32[1]{0}', space=sflag, size = 0x4, scoped, tag = 'scoped memory for tpu_custom_call.1']
    #allocation8 [shape = 'u8[3072]{0}', space=vmem, size = 0xc00, scoped, tag = 'input window, operand 2, single buffered']
    #allocation9 [shape = 'u8[16384]{0}', space=vmem, size = 0x4000, scoped, tag = 'output window, operand 0']
    %8 = vsyncpa [#allocation4], 0
    %s9 = scalar_lea.sflag [#allocation4], 1
    %10 = vsyncpa %s9, 0
    %11 = vsyncpa [#allocation7], 0
    %12 = vsyncpa [#allocation5], 0
    %s13 = scalar_lea.sflag [#allocation5], 1
    %14 = vsyncpa %s13, 0
    loop: start=0, step=1, limit=4
    $region2: #{tpu_custom_call.1} parent=1 // loop_pre_header
      _
    $region3: #{tpu_custom_call.1} parent=1 // loop_header
      %s16 = sphi 0, %s20
      %p17 = scmp.ge.s32.totalorder %s16, 4
      %s26 = sphi 0, %s28
      %s29 = sphi 0, %s26
      %s30 = sphi 0, %s29
      %s46 = sphi 0, %s30
      %s50 = sphi 0, %s50
      %s52 = sphi 0, %s50
      %s53 = sphi 0, %s52
      %s67 = sphi 0, %s53
      %s71 = sphi 0, %s71
      %s73 = sphi 0, %s71
      %s74 = sphi 0, %s73
      %s88 = sphi 0, %s74
      %s94 = sphi 0, %s96
      %s97 = sphi 0, %s94
      %s98 = sphi 0, %s97
      %s114 = sphi 0, %s98
    $region4: #{tpu_custom_call.1} parent=1 // loop_header_branch
      %19 = sbr.rel (%p17) target = $region8
    $region5: #{tpu_custom_call.1} parent=1 // loop_body
      %s21 = ssub.s32 %s16, 1
      %s22 = ssub.s32 %s16, 2
      %s23 = sadd.s32 %s16, 1
      %s24 = ssub.s32 %s16, %s23
      %p25 = scmp.eq.s32.totalorder %s24, 0
      %s27 = sadd.s32 %s26, 1
      %s28 = scalar_select %p25, %s26, %s27
      %p31 = pneg %p25
      %p32 = scmp.eq.s32.totalorder %s16, 1
      %p33 = por %p31, %p32
      %p34 = scmp.ne.s32.totalorder %s26, %s29
      %p35 = scmp.eq.s32.totalorder %s16, 0
      %p36 = por %p34, %p35
      %p37 = scmp.ne.s32.totalorder %s26, %s29
      %p38 = scmp.eq.s32.totalorder %s21, 1
      %p39 = por %p37, %p38
      %p40 = scmp.ne.s32.totalorder %s29, %s30
      %p41 = scmp.eq.s32.totalorder %s21, 0
      %p42 = por %p40, %p41
      %p43 = scmp.ne.s32.totalorder %s29, %s30
      %p44 = scmp.eq.s32.totalorder %s22, 1
      %p45 = por %p43, %p44
      %p47 = scmp.ne.s32.totalorder %s30, %s46
      %p48 = scmp.eq.s32.totalorder %s22, 0
      %p49 = por %p47, %p48
      %s51 = sadd.s32 %s50, 1
      %p54 = scmp.eq.s32.totalorder %s16, 1
      %p55 = scmp.ne.s32.totalorder %s50, %s52
      %p56 = scmp.eq.s32.totalorder %s16, 0
      %p57 = por %p55, %p56
      %p58 = scmp.ne.s32.totalorder %s50, %s52
      %p59 = scmp.eq.s32.totalorder %s21, 1
      %p60 = por %p58, %p59
      %p61 = scmp.ne.s32.totalorder %s52, %s53
      %p62 = scmp.eq.s32.totalorder %s21, 0
      %p63 = por %p61, %p62
      %p64 = scmp.ne.s32.totalorder %s52, %s53
      %p65 = scmp.eq.s32.totalorder %s22, 1
      %p66 = por %p64, %p65
      %p68 = scmp.ne.s32.totalorder %s53, %s67
      %p69 = scmp.eq.s32.totalorder %s22, 0
      %p70 = por %p68, %p69
      %s72 = sadd.s32 %s71, 1
      %p75 = scmp.eq.s32.totalorder %s16, 1
      %p76 = scmp.ne.s32.totalorder %s71, %s73
      %p77 = scmp.eq.s32.totalorder %s16, 0
      %p78 = por %p76, %p77
      %p79 = scmp.ne.s32.totalorder %s71, %s73
      %p80 = scmp.eq.s32.totalorder %s21, 1
      %p81 = por %p79, %p80
      %p82 = scmp.ne.s32.totalorder %s73, %s74
      %p83 = scmp.eq.s32.totalorder %s21, 0
      %p84 = por %p82, %p83
      %p85 = scmp.ne.s32.totalorder %s73, %s74
      %p86 = scmp.eq.s32.totalorder %s22, 1
      %p87 = por %p85, %p86
      %p89 = scmp.ne.s32.totalorder %s74, %s88
      %p90 = scmp.eq.s32.totalorder %s22, 0
      %p91 = por %p89, %p90
      %s92 = ssub.s32 %s16, %s23
      %p93 = scmp.eq.s32.totalorder %s92, 0
      %s95 = sadd.s32 %s94, 1
      %s96 = scalar_select %p93, %s94, %s95
      %p99 = pneg %p93
      %p100 = scmp.eq.s32.totalorder %s16, 1
      %p101 = por %p99, %p100
      %p102 = scmp.ne.s32.totalorder %s94, %s97
      %p103 = scmp.eq.s32.totalorder %s16, 0
      %p104 = por %p102, %p103
      %p105 = scmp.ne.s32.totalorder %s94, %s97
      %p106 = scmp.eq.s32.totalorder %s21, 1
      %p107 = por %p105, %p106
      %p108 = scmp.ne.s32.totalorder %s97, %s98
      %p109 = scmp.eq.s32.totalorder %s21, 0
      %p110 = por %p108, %p109
      %p111 = scmp.ne.s32.totalorder %s97, %s98
      %p112 = scmp.eq.s32.totalorder %s22, 1
      %p113 = por %p111, %p112
      %p115 = scmp.ne.s32.totalorder %s98, %s114
      %p116 = scmp.eq.s32.totalorder %s22, 0
      %p117 = por %p115, %p116
      %p118 = scmp.le.s32.totalorder 1, %s16
      %p119 = scmp.lt.s32.totalorder %s16, 3
      %p120 = pnand %p118, %p119
      %p121 = pneg %p120
      // Predicated region
      $region9: #{tpu_custom_call.1} parent=5 // pred_check
        _
      $region10: #{tpu_custom_call.1} parent=5 // pred_check_branch
        %123 = sbr.rel (%p120) target = $region12
      $region11: #{tpu_custom_call.1} parent=5 // pred_region
        %s124 = ssub.s32 %s16, 1
        // Predicated region
        $region13: #{tpu_custom_call.1} parent=11 // pred_check
          %p125 = pneg %p63
        $region14: #{tpu_custom_call.1} parent=11 // pred_check_branch
          %127 = sbr.rel (%p125) target = $region16
        $region15: #{tpu_custom_call.1} parent=11 // pred_region
          %s129 = ssub.s32 36864, 36864
          %130 = vsyncadd [#allocation7], %s129
          %s131 = sshll.u32 [#allocation6], 4
          %s132 = int_to_ptr.vmem [resolvable:$true] %s131
          %137 = dma.hbm_to_vmem [thread:$0]  %s1, 36864, %s132, [#allocation7], 128, 128, 8
        $region16: #{tpu_custom_call.1} parent=11 // pred_fallthru
          _
        // Predicated region
        $region17: #{tpu_custom_call.1} parent=11 // pred_check
          %p138 = pneg %p84
        $region18: #{tpu_custom_call.1} parent=11 // pred_check_branch
          %140 = sbr.rel (%p138) target = $region20
        $region19: #{tpu_custom_call.1} parent=11 // pred_region
          %s142 = ssub.s32 96, 96
          %143 = vsyncadd [#allocation7], %s142
          %s144 = sshll.u32 [#allocation8], 4
          %s145 = int_to_ptr.vmem [resolvable:$true] %s144
          %150 = dma.hbm_to_vmem [thread:$0]  %s2, 96, %s145, [#allocation7], 16, 16, 1
        $region20: #{tpu_custom_call.1} parent=11 // pred_fallthru
          _
      $region12: #{tpu_custom_call.1} parent=5 // pred_fallthru
        _
      %p151 = scmp.lt.s32.totalorder %s16, 2
      // Predicated region
      $region21: #{tpu_custom_call.1} parent=5 // pred_check
        %p152 = pneg %p151
      $region22: #{tpu_custom_call.1} parent=5 // pred_check_branch
        %154 = sbr.rel (%p152) target = $region24
      $region23: #{tpu_custom_call.1} parent=5 // pred_region
        // Predicated region
        $region25: #{tpu_custom_call.1} parent=23 // pred_check
          %p155 = pneg %p36
        $region26: #{tpu_custom_call.1} parent=23 // pred_check_branch
          %157 = sbr.rel (%p155) target = $region28
        $region27: #{tpu_custom_call.1} parent=23 // pred_region
          %s158 = sand.u32 %s26, 1
          %s159 = scalar_lea.sflag [#allocation4], %s158
          %s160 = sand.u32 %s26, 1
          %s161 = smul.addr %s160, 16
          %s162 = scalar_lea.vmem [#allocation3], %s161
          %s164 = ssub.s32 256, 256
          %165 = vsyncadd %s159, %s164
          %s166 = smul.addr %s16, 2
          %s167 = smul.addr %s166, 128
          %s168 = scalar_lea.hbm %s0, %s167
          %s169 = sshll.u32 %s162, 4
          %s170 = int_to_ptr.vmem [resolvable:$true] %s169
          %175 = dma.hbm_to_vmem [thread:$0]  %s168, 256, %s170, %s159, 128, 128, 8
        $region28: #{tpu_custom_call.1} parent=23 // pred_fallthru
          _
      $region24: #{tpu_custom_call.1} parent=5 // pred_fallthru
        _
      %p176 = scmp.le.s32.totalorder 1, %s16
      %p177 = scmp.lt.s32.totalorder %s16, 3
      %p178 = pnand %p176, %p177
      %p179 = pneg %p178
      // Predicated region
      $region29: #{tpu_custom_call.1} parent=5 // pred_check
        _
      $region30: #{tpu_custom_call.1} parent=5 // pred_check_branch
        %181 = sbr.rel (%p178) target = $region32
      $region31: #{tpu_custom_call.1} parent=5 // pred_region
        %s182 = ssub.s32 %s16, 1
        %s183 = sand.u32 %s29, 1
        %s184 = scalar_lea.sflag [#allocation4], %s183
        %s185 = sand.u32 %s29, 1
        %s186 = smul.addr %s185, 16
        %s187 = scalar_lea.vmem [#allocation3], %s186
        // Predicated region
        $region33: #{tpu_custom_call.1} parent=31 // pred_check
          %p188 = pneg %p42
        $region34: #{tpu_custom_call.1} parent=31 // pred_check_branch
          %190 = sbr.rel (%p188) target = $region36
        $region35: #{tpu_custom_call.1} parent=31 // pred_region
          %191 = dma.done %s184, 256
        $region36: #{tpu_custom_call.1} parent=31 // pred_fallthru
          _
        // Predicated region
        $region37: #{tpu_custom_call.1} parent=31 // pred_check
          %p192 = pneg %p63
        $region38: #{tpu_custom_call.1} parent=31 // pred_check_branch
          %194 = sbr.rel (%p192) target = $region40
        $region39: #{tpu_custom_call.1} parent=31 // pred_region
          %195 = dma.done [#allocation7], 36864
        $region40: #{tpu_custom_call.1} parent=31 // pred_fallthru
          _
        // Predicated region
        $region41: #{tpu_custom_call.1} parent=31 // pred_check
          %p196 = pneg %p84
        $region42: #{tpu_custom_call.1} parent=31 // pred_check_branch
          %198 = sbr.rel (%p196) target = $region44
        $region43: #{tpu_custom_call.1} parent=31 // pred_region
          %199 = dma.done [#allocation7], 96
        $region44: #{tpu_custom_call.1} parent=31 // pred_fallthru
          _
        %s200 = sand.u32 %s29, 1
        %s201 = scalar_lea.sflag [#allocation4], %s200
        %s202 = sand.u32 %s29, 1
        %s203 = smul.addr %s202, 16
        %s204 = scalar_lea.vmem [#allocation3], %s203
        %p205 = pneg %p42
        %p206 = pneg %p39
        %p207 = pneg %p63
        %p208 = pneg %p60
        %p209 = pneg %p84
        %p210 = pneg %p81
        %p211 = pneg %p110
        %p212 = pneg %p107
        %s213 = sand.u32 %s97, 1
        %s214 = scalar_lea.sflag [#allocation5], %s213
        %s215 = sand.u32 %s97, 1
        %s216 = smul.addr %s215, 16
        %s217 = scalar_lea.vmem [#allocation9], %s216
        %218 = vst [vmem:[#allocation2] sm:$0x1f] 0.0
        %219 = vst [vmem:[#allocation2 + $0x15] sm:$0xff] 0.0
        %220 = vst [vmem:[#allocation2 + $0x1d] sm:$0x7] 0.0
        %v221 = vld [vmem:[%s187] sm:$0xff]
        %v222 = vld [vmem:[%s187 + $0x8] sm:$0xff]
        %vm223 = vcmp.gt.f32.partialorder %v221, 0.0
        %vm224 = vcmp.gt.f32.partialorder %v222, 0.0
        %v225 = vmul.f32 %v221, 0.1
        %v226 = vmul.f32 %v222, 0.1
        %v227 = vsel %vm223, %v221, %v225
        %v228 = vsel %vm224, %v222, %v226
        %229 = vst [vmem:[#allocation2 + $0x5] sm:$0xff] %v227
        %230 = vst [vmem:[#allocation2 + $0xd] sm:$0xff] %v228
        %v231 = vld [vmem:[#allocation2 + $0x4] sm:$0xff]
        %v232 = vld [vmem:[#allocation2 + $0xc] sm:$0xff]
        %v233 = vld [vmem:[#allocation6] sm:$0xff]
        %v234 = vld [vmem:[#allocation6 + $0x8] sm:$0xff]
        %v235 = vld [vmem:[#allocation6 + $0x10] sm:$0xff]
        %v236 = vld [vmem:[#allocation6 + $0x18] sm:$0xff]
        %v237 = vld [vmem:[#allocation6 + $0x20] sm:$0xff]
        %v238 = vld [vmem:[#allocation6 + $0x28] sm:$0xff]
        %v239 = vld [vmem:[#allocation6 + $0x30] sm:$0xff]
        %v240 = vld [vmem:[#allocation6 + $0x38] sm:$0xff]
        %v241 = vld [vmem:[#allocation6 + $0x40] sm:$0xff]
        %v242 = vld [vmem:[#allocation6 + $0x48] sm:$0xff]
        %v243 = vld [vmem:[#allocation6 + $0x50] sm:$0xff]
        %v244 = vld [vmem:[#allocation6 + $0x58] sm:$0xff]
        %v245 = vld [vmem:[#allocation6 + $0x60] sm:$0xff]
        %v246 = vld [vmem:[#allocation6 + $0x68] sm:$0xff]
        %v247 = vld [vmem:[#allocation6 + $0x70] sm:$0xff]
        %v248 = vld [vmem:[#allocation6 + $0x78] sm:$0xff]
        %v249 = vld [vmem:[#allocation2 + $0x5] sm:$0xff]
        %v250 = vld [vmem:[#allocation2 + $0xd] sm:$0xff]
        %s251 = scalar_lea.vmem [#allocation6], 128
        %v252 = vld [vmem:[%s251] sm:$0xff]
        %v253 = vld [vmem:[%s251 + $0x8] sm:$0xff]
        %v254 = vld [vmem:[%s251 + $0x10] sm:$0xff]
        %v255 = vld [vmem:[%s251 + $0x18] sm:$0xff]
        %v256 = vld [vmem:[%s251 + $0x20] sm:$0xff]
        %v257 = vld [vmem:[%s251 + $0x28] sm:$0xff]
        %v258 = vld [vmem:[%s251 + $0x30] sm:$0xff]
        %v259 = vld [vmem:[%s251 + $0x38] sm:$0xff]
        %v260 = vld [vmem:[%s251 + $0x40] sm:$0xff]
        %v261 = vld [vmem:[%s251 + $0x48] sm:$0xff]
        %v262 = vld [vmem:[%s251 + $0x50] sm:$0xff]
        %v263 = vld [vmem:[%s251 + $0x58] sm:$0xff]
        %v264 = vld [vmem:[%s251 + $0x60] sm:$0xff]
        %v265 = vld [vmem:[%s251 + $0x68] sm:$0xff]
        %v266 = vld [vmem:[%s251 + $0x70] sm:$0xff]
        %v267 = vld [vmem:[%s251 + $0x78] sm:$0xff]
        %268 = vmatprep.subr.mxu0 0.0
        %269 = vmatpush1.msra.mxu0 %v252
        %270 = vmatprep.subr.mxu0 0.0
        %271 = vmatpush1.msra.mxu0 %v253
        %272 = vmatprep.subr.mxu0 0.0
        %273 = vmatpush1.msra.mxu0 %v254
        %274 = vmatprep.subr.mxu0 0.0
        %275 = vmatpush1.msra.mxu0 %v255
        %276 = vmatprep.subr.mxu0 0.0
        %277 = vmatpush1.msra.mxu0 %v256
        %278 = vmatprep.subr.mxu0 0.0
        %279 = vmatpush1.msra.mxu0 %v257
        %280 = vmatprep.subr.mxu0 0.0
        %281 = vmatpush1.msra.mxu0 %v258
        %282 = vmatprep.subr.mxu0 0.0
        %283 = vmatpush1.msra.mxu0 %v259
        %284 = vmatprep.subr.mxu0 0.0
        %285 = vmatpush1.msra.mxu0 %v260
        %286 = vmatprep.subr.mxu0 0.0
        %287 = vmatpush1.msra.mxu0 %v261
        %288 = vmatprep.subr.mxu0 0.0
        %289 = vmatpush1.msra.mxu0 %v262
        %290 = vmatprep.subr.mxu0 0.0
        %291 = vmatpush1.msra.mxu0 %v263
        %292 = vmatprep.subr.mxu0 0.0
        %293 = vmatpush1.msra.mxu0 %v264
        %294 = vmatprep.subr.mxu0 0.0
        %295 = vmatpush1.msra.mxu0 %v265
        %296 = vmatprep.subr.mxu0 0.0
        %297 = vmatpush1.msra.mxu0 %v266
        %298 = vmatprep.subr.mxu0 0.0
        %299 = vmatpush1.msra.mxu0 %v267
        %300 = vmatprep.subr.mxu0 0.0
        %301 = vmatpush1.msra.mxu0 0.0
        %302 = vmatprep.subr.mxu0 0.0
        %303 = vmatpush1.msra.mxu0 0.0
        %304 = vmatprep.subr.mxu0 0.0
        %305 = vmatpush1.msra.mxu0 0.0
        %306 = vmatprep.subr.mxu0 0.0
        %307 = vmatpush1.msra.mxu0 0.0
        %308 = vmatprep.subr.mxu0 0.0
        %309 = vmatpush1.msra.mxu0 0.0
        %310 = vmatprep.subr.mxu0 0.0
        %311 = vmatpush1.msra.mxu0 0.0
        %312 = vmatprep.subr.mxu0 0.0
        %313 = vmatpush1.msra.mxu0 0.0
        %314 = vmatprep.subr.mxu0 0.0
        %315 = vmatpush1.msra.mxu0 0.0
        %316 = vmatprep.subr.mxu0 0.0
        %317 = vmatpush1.msra.mxu0 0.0
        %318 = vmatprep.subr.mxu0 0.0
        %319 = vmatpush1.msra.mxu0 0.0
        %320 = vmatprep.subr.mxu0 0.0
        %321 = vmatpush1.msra.mxu0 0.0
        %322 = vmatprep.subr.mxu0 0.0
        %323 = vmatpush1.msra.mxu0 0.0
        %324 = vmatprep.subr.mxu0 0.0
        %325 = vmatpush1.msra.mxu0 0.0
        %326 = vmatprep.subr.mxu0 0.0
        %327 = vmatpush1.msra.mxu0 0.0
        %328 = vmatprep.subr.mxu0 0.0
        %329 = vmatpush1.msra.mxu0 0.0
        %330 = vmatprep.subr.mxu0 0.0
        %331 = vmatpush1.msra.mxu0 0.0
        %332 = vmatprep.mubr.f32.mxu0 0.0
        %333 = vmatmul.mubr.f32.gmra.mrb[0].mxu0 %v249
        %v334 = vpop.f32.mrb[0].mxu0
        %v335 = vadd.f32 0.0, %v334
        %v336 = vpop.f32.mrb[0].mxu0
        %337 = vmatprep.mubr.f32.mxu0 0.0
        %338 = vmatmul.mubr.f32.gmra.mrb[0].mxu0 %v250
        %v339 = vpop.f32.mrb[0].mxu0
        %v340 = vadd.f32 0.0, %v339
        %v341 = vpop.f32.mrb[0].mxu0
        %342 = vdwg.mxu0
        %343 = vmatprep.subr.mxu0 0.0
        %344 = vmatpush1.msra.mxu0 %v233
        %345 = vmatprep.subr.mxu0 0.0
        %346 = vmatpush1.msra.mxu0 %v234
        %347 = vmatprep.subr.mxu0 0.0
        %348 = vmatpush1.msra.mxu0 %v235
        %349 = vmatprep.subr.mxu0 0.0
        %350 = vmatpush1.msra.mxu0 %v236
        %351 = vmatprep.subr.mxu0 0.0
        %352 = vmatpush1.msra.mxu0 %v237
        %353 = vmatprep.subr.mxu0 0.0
        %354 = vmatpush1.msra.mxu0 %v238
        %355 = vmatprep.subr.mxu0 0.0
        %356 = vmatpush1.msra.mxu0 %v239
        %357 = vmatprep.subr.mxu0 0.0
        %358 = vmatpush1.msra.mxu0 %v240
        %359 = vmatprep.subr.mxu0 0.0
        %360 = vmatpush1.msra.mxu0 %v241
        %361 = vmatprep.subr.mxu0 0.0
        %362 = vmatpush1.msra.mxu0 %v242
        %363 = vmatprep.subr.mxu0 0.0
        %364 = vmatpush1.msra.mxu0 %v243
        %365 = vmatprep.subr.mxu0 0.0
        %366 = vmatpush1.msra.mxu0 %v244
        %367 = vmatprep.subr.mxu0 0.0
        %368 = vmatpush1.msra.mxu0 %v245
        %369 = vmatprep.subr.mxu0 0.0
        %370 = vmatpush1.msra.mxu0 %v246
        %371 = vmatprep.subr.mxu0 0.0
        %372 = vmatpush1.msra.mxu0 %v247
        %373 = vmatprep.subr.mxu0 0.0
        %374 = vmatpush1.msra.mxu0 %v248
        %375 = vmatprep.subr.mxu0 0.0
        %376 = vmatpush1.msra.mxu0 0.0
        %377 = vmatprep.subr.mxu0 0.0
        %378 = vmatpush1.msra.mxu0 0.0
        %379 = vmatprep.subr.mxu0 0.0
        %380 = vmatpush1.msra.mxu0 0.0
        %381 = vmatprep.subr.mxu0 0.0
        %382 = vmatpush1.msra.mxu0 0.0
        %383 = vmatprep.subr.mxu0 0.0
        %384 = vmatpush1.msra.mxu0 0.0
        %385 = vmatprep.subr.mxu0 0.0
        %386 = vmatpush1.msra.mxu0 0.0
        %387 = vmatprep.subr.mxu0 0.0
        %388 = vmatpush1.msra.mxu0 0.0
        %389 = vmatprep.subr.mxu0 0.0
        %390 = vmatpush1.msra.mxu0 0.0
        %391 = vmatprep.subr.mxu0 0.0
        %392 = vmatpush1.msra.mxu0 0.0
        %393 = vmatprep.subr.mxu0 0.0
        %394 = vmatpush1.msra.mxu0 0.0
        %395 = vmatprep.subr.mxu0 0.0
        %396 = vmatpush1.msra.mxu0 0.0
        %397 = vmatprep.subr.mxu0 0.0
        %398 = vmatpush1.msra.mxu0 0.0
        %399 = vmatprep.subr.mxu0 0.0
        %400 = vmatpush1.msra.mxu0 0.0
        %401 = vmatprep.subr.mxu0 0.0
        %402 = vmatpush1.msra.mxu0 0.0
        %403 = vmatprep.subr.mxu0 0.0
        %404 = vmatpush1.msra.mxu0 0.0
        %405 = vmatprep.subr.mxu0 0.0
        %406 = vmatpush1.msra.mxu0 0.0
        %407 = vmatprep.mubr.f32.mxu0 0.0
        %408 = vmatmul.mubr.f32.gmra.mrb[0].mxu0 %v231
        %v409 = vpop.f32.mrb[0].mxu0
        %v410 = vadd.f32 %v335, %v409
        %v411 = vpop.f32.mrb[0].mxu0
        %412 = vmatprep.mubr.f32.mxu0 0.0
        %413 = vmatmul.mubr.f32.gmra.mrb[0].mxu0 %v232
        %v414 = vpop.f32.mrb[0].mxu0
        %v415 = vadd.f32 %v340, %v414
        %v416 = vpop.f32.mrb[0].mxu0
        %417 = vdwg.mxu0
        %v418 = vld [vmem:[#allocation2 + $0x6] sm:$0xff]
        %v419 = vld [vmem:[#allocation2 + $0xe] sm:$0xff]
        %s420 = scalar_lea.vmem [#allocation6], 256
        %v421 = vld [vmem:[%s420] sm:$0xff]
        %v422 = vld [vmem:[%s420 + $0x8] sm:$0xff]
        %v423 = vld [vmem:[%s420 + $0x10] sm:$0xff]
        %v424 = vld [vmem:[%s420 + $0x18] sm:$0xff]
        %v425 = vld [vmem:[%s420 + $0x20] sm:$0xff]
        %v426 = vld [vmem:[%s420 + $0x28] sm:$0xff]
        %v427 = vld [vmem:[%s420 + $0x30] sm:$0xff]
        %v428 = vld [vmem:[%s420 + $0x38] sm:$0xff]
        %v429 = vld [vmem:[%s420 + $0x40] sm:$0xff]
        %v430 = vld [vmem:[%s420 + $0x48] sm:$0xff]
        %v431 = vld [vmem:[%s420 + $0x50] sm:$0xff]
        %v432 = vld [vmem:[%s420 + $0x58] sm:$0xff]
        %v433 = vld [vmem:[%s420 + $0x60] sm:$0xff]
        %v434 = vld [vmem:[%s420 + $0x68] sm:$0xff]
        %v435 = vld [vmem:[%s420 + $0x70] sm:$0xff]
        %v436 = vld [vmem:[%s420 + $0x78] sm:$0xff]
        %437 = vmatprep.subr.mxu0 0.0
        %438 = vmatpush1.msra.mxu0 %v421
        %439 = vmatprep.subr.mxu0 0.0
        %440 = vmatpush1.msra.mxu0 %v422
        %441 = vmatprep.subr.mxu0 0.0
        %442 = vmatpush1.msra.mxu0 %v423
        %443 = vmatprep.subr.mxu0 0.0
        %444 = vmatpush1.msra.mxu0 %v424
        %445 = vmatprep.subr.mxu0 0.0
        %446 = vmatpush1.msra.mxu0 %v425
        %447 = vmatprep.subr.mxu0 0.0
        %448 = vmatpush1.msra.mxu0 %v426
        %449 = vmatprep.subr.mxu0 0.0
        %450 = vmatpush1.msra.mxu0 %v427
        %451 = vmatprep.subr.mxu0 0.0
        %452 = vmatpush1.msra.mxu0 %v428
        %453 = vmatprep.subr.mxu0 0.0
        %454 = vmatpush1.msra.mxu0 %v429
        %455 = vmatprep.subr.mxu0 0.0
        %456 = vmatpush1.msra.mxu0 %v430
        %457 = vmatprep.subr.mxu0 0.0
        %458 = vmatpush1.msra.mxu0 %v431
        %459 = vmatprep.subr.mxu0 0.0
        %460 = vmatpush1.msra.mxu0 %v432
        %461 = vmatprep.subr.mxu0 0.0
        %462 = vmatpush1.msra.mxu0 %v433
        %463 = vmatprep.subr.mxu0 0.0
        %464 = vmatpush1.msra.mxu0 %v434
        %465 = vmatprep.subr.mxu0 0.0
        %466 = vmatpush1.msra.mxu0 %v435
        %467 = vmatprep.subr.mxu0 0.0
        %468 = vmatpush1.msra.mxu0 %v436
        %469 = vmatprep.subr.mxu0 0.0
        %470 = vmatpush1.msra.mxu0 0.0
        %471 = vmatprep.subr.mxu0 0.0
        %472 = vmatpush1.msra.mxu0 0.0
        %473 = vmatprep.subr.mxu0 0.0
        %474 = vmatpush1.msra.mxu0 0.0
        %475 = vmatprep.subr.mxu0 0.0
        %476 = vmatpush1.msra.mxu0 0.0
        %477 = vmatprep.subr.mxu0 0.0
        %478 = vmatpush1.msra.mxu0 0.0
        %479 = vmatprep.subr.mxu0 0.0
        %480 = vmatpush1.msra.mxu0 0.0
        %481 = vmatprep.subr.mxu0 0.0
        %482 = vmatpush1.msra.mxu0 0.0
        %483 = vmatprep.subr.mxu0 0.0
        %484 = vmatpush1.msra.mxu0 0.0
        %485 = vmatprep.subr.mxu0 0.0
        %486 = vmatpush1.msra.mxu0 0.0
        %487 = vmatprep.subr.mxu0 0.0
        %488 = vmatpush1.msra.mxu0 0.0
        %489 = vmatprep.subr.mxu0 0.0
        %490 = vmatpush1.msra.mxu0 0.0
        %491 = vmatprep.subr.mxu0 0.0
        %492 = vmatpush1.msra.mxu0 0.0
        %493 = vmatprep.subr.mxu0 0.0
        %494 = vmatpush1.msra.mxu0 0.0
        %495 = vmatprep.subr.mxu0 0.0
        %496 = vmatpush1.msra.mxu0 0.0
        %497 = vmatprep.subr.mxu0 0.0
        %498 = vmatpush1.msra.mxu0 0.0
        %499 = vmatprep.subr.mxu0 0.0
        %500 = vmatpush1.msra.mxu0 0.0
        %501 = vmatprep.mubr.f32.mxu0 0.0
        %502 = vmatmul.mubr.f32.gmra.mrb[0].mxu0 %v418
        %v503 = vpop.f32.mrb[0].mxu0
        %v504 = vadd.f32 0.0, %v503
        %v505 = vpop.f32.mrb[0].mxu0
        %506 = vmatprep.mubr.f32.mxu0 0.0
        %507 = vmatmul.mubr.f32.gmra.mrb[0].mxu0 %v419
        %v508 = vpop.f32.mrb[0].mxu0
        %v509 = vadd.f32 0.0, %v508
        %v510 = vpop.f32.mrb[0].mxu0
        %511 = vdwg.mxu0
        %v512 = vadd.f32 %v410, %v504
        %v513 = vadd.f32 %v415, %v509
        %v514 = vld [vmem:[#allocation8] sm:$0x1]
        %v516 = vlaneseq
        %v517 = vshrl.u32 %v516, 7
        %v518 = vsub.s32 0, %v517
        %v519 = vrot.slane %v514, %v518
        %v521 = vadd.f32 %v512, %v519
        %v522 = vadd.f32 %v513, %v519
        %vm523 = vcmp.gt.f32.partialorder %v521, 0.0
        %vm524 = vcmp.gt.f32.partialorder %v522, 0.0
        %v525 = vmul.f32 %v521, 0.1
        %v526 = vmul.f32 %v522, 0.1
        %v527 = vsel %vm523, %v521, %v525
        %v528 = vsel %vm524, %v522, %v526
        %529 = vst [vmem:[#allocation2 + $0x5] sm:$0xff] %v527
        %530 = vst [vmem:[#allocation2 + $0xd] sm:$0xff] %v528
        %v531 = vld [vmem:[#allocation2 + $0x4] sm:$0xff]
        %v532 = vld [vmem:[#allocation2 + $0xc] sm:$0xff]
        %s533 = scalar_lea.vmem [#allocation6], 384
        %v534 = vld [vmem:[%s533] sm:$0xff]
        %v535 = vld [vmem:[%s533 + $0x8] sm:$0xff]
        %v536 = vld [vmem:[%s533 + $0x10] sm:$0xff]
        %v537 = vld [vmem:[%s533 + $0x18] sm:$0xff]
        %v538 = vld [vmem:[%s533 + $0x20] sm:$0xff]
        %v539 = vld [vmem:[%s533 + $0x28] sm:$0xff]
        %v540 = vld [vmem:[%s533 + $0x30] sm:$0xff]
        %v541 = vld [vmem:[%s533 + $0x38] sm:$0xff]
        %v542 = vld [vmem:[%s533 + $0x40] sm:$0xff]
        %v543 = vld [vmem:[%s533 + $0x48] sm:$0xff]
        %v544 = vld [vmem:[%s533 + $0x50] sm:$0xff]
        %v545 = vld [vmem:[%s533 + $0x58] sm:$0xff]
        %v546 = vld [vmem:[%s533 + $0x60] sm:$0xff]
        %v547 = vld [vmem:[%s533 + $0x68] sm:$0xff]
        %v548 = vld [vmem:[%s533 + $0x70] sm:$0xff]
        %v549 = vld [vmem:[%s533 + $0x78] sm:$0xff]
        %v550 = vld [vmem:[#allocation2 + $0x5] sm:$0xff]
        %v551 = vld [vmem:[#allocation2 + $0xd] sm:$0xff]
        %s552 = scalar_lea.vmem [#allocation6], 512
        %v553 = vld [vmem:[%s552] sm:$0xff]
        %v554 = vld [vmem:[%s552 + $0x8] sm:$0xff]
        %v555 = vld [vmem:[%s552 + $0x10] sm:$0xff]
        %v556 = vld [vmem:[%s552 + $0x18] sm:$0xff]
        %v557 = vld [vmem:[%s552 + $0x20] sm:$0xff]
        %v558 = vld [vmem:[%s552 + $0x28] sm:$0xff]
        %v559 = vld [vmem:[%s552 + $0x30] sm:$0xff]
        %v560 = vld [vmem:[%s552 + $0x38] sm:$0xff]
        %v561 = vld [vmem:[%s552 + $0x40] sm:$0xff]
        %v562 = vld [vmem:[%s552 + $0x48] sm:$0xff]
        %v563 = vld [vmem:[%s552 + $0x50] sm:$0xff]
        %v564 = vld [vmem:[%s552 + $0x58] sm:$0xff]
        %v565 = vld [vmem:[%s552 + $0x60] sm:$0xff]
        %v566 = vld [vmem:[%s552 + $0x68] sm:$0xff]
        %v567 = vld [vmem:[%s552 + $0x70] sm:$0xff]
        %v568 = vld [vmem:[%s552 + $0x78] sm:$0xff]
        %569 = vmatprep.subr.mxu0 0.0
        %570 = vmatpush1.msra.mxu0 %v553
        %571 = vmatprep.subr.mxu0 0.0
        %572 = vmatpush1.msra.mxu0 %v554
        %573 = vmatprep.subr.mxu0 0.0
        %574 = vmatpush1.msra.mxu0 %v555
        %575 = vmatprep.subr.mxu0 0.0
        %576 = vmatpush1.msra.mxu0 %v556
        %577 = vmatprep.subr.mxu0 0.0
        %578 = vmatpush1.msra.mxu0 %v557
        %579 = vmatprep.subr.mxu0 0.0
        %580 = vmatpush1.msra.mxu0 %v558
        %581 = vmatprep.subr.mxu0 0.0
        %582 = vmatpush1.msra.mxu0 %v559
        %583 = vmatprep.subr.mxu0 0.0
        %584 = vmatpush1.msra.mxu0 %v560
        %585 = vmatprep.subr.mxu0 0.0
        %586 = vmatpush1.msra.mxu0 %v561
        %587 = vmatprep.subr.mxu0 0.0
        %588 = vmatpush1.msra.mxu0 %v562
        %589 = vmatprep.subr.mxu0 0.0
        %590 = vmatpush1.msra.mxu0 %v563
        %591 = vmatprep.subr.mxu0 0.0
        %592 = vmatpush1.msra.mxu0 %v564
        %593 = vmatprep.subr.mxu0 0.0
        %594 = vmatpush1.msra.mxu0 %v565
        %595 = vmatprep.subr.mxu0 0.0
        %596 = vmatpush1.msra.mxu0 %v566
        %597 = vmatprep.subr.mxu0 0.0
        %598 = vmatpush1.msra.mxu0 %v567
        %599 = vmatprep.subr.mxu0 0.0
        %600 = vmatpush1.msra.mxu0 %v568
        %601 = vmatprep.subr.mxu0 0.0
        %602 = vmatpush1.msra.mxu0 0.0
        %603 = vmatprep.subr.mxu0 0.0
        %604 = vmatpush1.msra.mxu0 0.0
        %605 = vmatprep.subr.mxu0 0.0
        %606 = vmatpush1.msra.mxu0 0.0
        %607 = vmatprep.subr.mxu0 0.0
        %608 = vmatpush1.msra.mxu0 0.0
        %609 = vmatprep.subr.mxu0 0.0
        %610 = vmatpush1.msra.mxu0 0.0
        %611 = vmatprep.subr.mxu0 0.0
        %612 = vmatpush1.msra.mxu0 0.0
        %613 = vmatprep.subr.mxu0 0.0
        %614 = vmatpush1.msra.mxu0 0.0
        %615 = vmatprep.subr.mxu0 0.0
        %616 = vmatpush1.msra.mxu0 0.0
        %617 = vmatprep.subr.mxu0 0.0
        %618 = vmatpush1.msra.mxu0 0.0
        %619 = vmatprep.subr.mxu0 0.0
        %620 = vmatpush1.msra.mxu0 0.0
        %621 = vmatprep.subr.mxu0 0.0
        %622 = vmatpush1.msra.mxu0 0.0
        %623 = vmatprep.subr.mxu0 0.0
        %624 = vmatpush1.msra.mxu0 0.0
        %625 = vmatprep.subr.mxu0 0.0
        %626 = vmatpush1.msra.mxu0 0.0
        %627 = vmatprep.subr.mxu0 0.0
        %628 = vmatpush1.msra.mxu0 0.0
        %629 = vmatprep.subr.mxu0 0.0
        %630 = vmatpush1.msra.mxu0 0.0
        %631 = vmatprep.subr.mxu0 0.0
        %632 = vmatpush1.msra.mxu0 0.0
        %633 = vmatprep.mubr.f32.mxu0 0.0
        %634 = vmatmul.mubr.f32.gmra.mrb[0].mxu0 %v550
        %v635 = vpop.f32.mrb[0].mxu0
        %v636 = vadd.f32 0.0, %v635
        %v637 = vpop.f32.mrb[0].mxu0
        %638 = vmatprep.mubr.f32.mxu0 0.0
        %639 = vmatmul.mubr.f32.gmra.mrb[0].mxu0 %v551
        %v640 = vpop.f32.mrb[0].mxu0
        %v641 = vadd.f32 0.0, %v640
        %v642 = vpop.f32.mrb[0].mxu0
        %643 = vdwg.mxu0
        %644 = vmatprep.subr.mxu0 0.0
        %645 = vmatpush1.msra.mxu0 %v534
        %646 = vmatprep.subr.mxu0 0.0
        %647 = vmatpush1.msra.mxu0 %v535
        %648 = vmatprep.subr.mxu0 0.0
        %649 = vmatpush1.msra.mxu0 %v536
        %650 = vmatprep.subr.mxu0 0.0
        %651 = vmatpush1.msra.mxu0 %v537
        %652 = vmatprep.subr.mxu0 0.0
        %653 = vmatpush1.msra.mxu0 %v538
        %654 = vmatprep.subr.mxu0 0.0
        %655 = vmatpush1.msra.mxu0 %v539
        %656 = vmatprep.subr.mxu0 0.0
        %657 = vmatpush1.msra.mxu0 %v540
        %658 = vmatprep.subr.mxu0 0.0
        %659 = vmatpush1.msra.mxu0 %v541
        %660 = vmatprep.subr.mxu0 0.0
        %661 = vmatpush1.msra.mxu0 %v542
        %662 = vmatprep.subr.mxu0 0.0
        %663 = vmatpush1.msra.mxu0 %v543
        %664 = vmatprep.subr.mxu0 0.0
        %665 = vmatpush1.msra.mxu0 %v544
        %666 = vmatprep.subr.mxu0 0.0
        %667 = vmatpush1.msra.mxu0 %v545
        %668 = vmatprep.subr.mxu0 0.0
        %669 = vmatpush1.msra.mxu0 %v546
        %670 = vmatprep.subr.mxu0 0.0
        %671 = vmatpush1.msra.mxu0 %v547
        %672 = vmatprep.subr.mxu0 0.0
        %673 = vmatpush1.msra.mxu0 %v548
        %674 = vmatprep.subr.mxu0 0.0
        %675 = vmatpush1.msra.mxu0 %v549
        %676 = vmatprep.subr.mxu0 0.0
        %677 = vmatpush1.msra.mxu0 0.0
        %678 = vmatprep.subr.mxu0 0.0
        %679 = vmatpush1.msra.mxu0 0.0
        %680 = vmatprep.subr.mxu0 0.0
        %681 = vmatpush1.msra.mxu0 0.0
        %682 = vmatprep.subr.mxu0 0.0
        %683 = vmatpush1.msra.mxu0 0.0
        %684 = vmatprep.subr.mxu0 0.0
        %685 = vmatpush1.msra.mxu0 0.0
        %686 = vmatprep.subr.mxu0 0.0
        %687 = vmatpush1.msra.mxu0 0.0
        %688 = vmatprep.subr.mxu0 0.0
        %689 = vmatpush1.msra.mxu0 0.0
        %690 = vmatprep.subr.mxu0 0.0
        %691 = vmatpush1.msra.mxu0 0.0
        %692 = vmatprep.subr.mxu0 0.0
        %693 = vmatpush1.msra.mxu0 0.0
        %694 = vmatprep.subr.mxu0 0.0
        %695 = vmatpush1.msra.mxu0 0.0
        %696 = vmatprep.subr.mxu0 0.0
        %697 = vmatpush1.msra.mxu0 0.0
        %698 = vmatprep.subr.mxu0 0.0
        %699 = vmatpush1.msra.mxu0 0.0
        %700 = vmatprep.subr.mxu0 0.0
        %701 = vmatpush1.msra.mxu0 0.0
        %702 = vmatprep.subr.mxu0 0.0
        %703 = vmatpush1.msra.mxu0 0.0
        %704 = vmatprep.subr.mxu0 0.0
        %705 = vmatpush1.msra.mxu0 0.0
        %706 = vmatprep.subr.mxu0 0.0
        %707 = vmatpush1.msra.mxu0 0.0
        %708 = vmatprep.mubr.f32.mxu0 0.0
        %709 = vmatmul.mubr.f32.gmra.mrb[0].mxu0 %v531
        %v710 = vpop.f32.mrb[0].mxu0
        %v711 = vadd.f32 %v636, %v710
        %v712 = vpop.f32.mrb[0].mxu0
        %713 = vmatprep.mubr.f32.mxu0 0.0
        %714 = vmatmul.mubr.f32.gmra.mrb[0].mxu0 %v532
        %v715 = vpop.f32.mrb[0].mxu0
        %v716 = vadd.f32 %v641, %v715
        %v717 = vpop.f32.mrb[0].mxu0
        %718 = vdwg.mxu0
        %v719 = vld [vmem:[#allocation2 + $0x6] sm:$0xff]
        %v720 = vld [vmem:[#allocation2 + $0xe] sm:$0xff]
        %s721 = scalar_lea.vmem [#allocation6], 640
        %v722 = vld [vmem:[%s721] sm:$0xff]
        %v723 = vld [vmem:[%s721 + $0x8] sm:$0xff]
        %v724 = vld [vmem:[%s721 + $0x10] sm:$0xff]
        %v725 = vld [vmem:[%s721 + $0x18] sm:$0xff]
        %v726 = vld [vmem:[%s721 + $0x20] sm:$0xff]
        %v727 = vld [vmem:[%s721 + $0x28] sm:$0xff]
        %v728 = vld [vmem:[%s721 + $0x30] sm:$0xff]
        %v729 = vld [vmem:[%s721 + $0x38] sm:$0xff]
        %v730 = vld [vmem:[%s721 + $0x40] sm:$0xff]
        %v731 = vld [vmem:[%s721 + $0x48] sm:$0xff]
        %v732 = vld [vmem:[%s721 + $0x50] sm:$0xff]
        %v733 = vld [vmem:[%s721 + $0x58] sm:$0xff]
        %v734 = vld [vmem:[%s721 + $0x60] sm:$0xff]
        %v735 = vld [vmem:[%s721 + $0x68] sm:$0xff]
        %v736 = vld [vmem:[%s721 + $0x70] sm:$0xff]
        %v737 = vld [vmem:[%s721 + $0x78] sm:$0xff]
        %738 = vmatprep.subr.mxu0 0.0
        %739 = vmatpush1.msra.mxu0 %v722
        %740 = vmatprep.subr.mxu0 0.0
        %741 = vmatpush1.msra.mxu0 %v723
        %742 = vmatprep.subr.mxu0 0.0
        %743 = vmatpush1.msra.mxu0 %v724
        %744 = vmatprep.subr.mxu0 0.0
        %745 = vmatpush1.msra.mxu0 %v725
        %746 = vmatprep.subr.mxu0 0.0
        %747 = vmatpush1.msra.mxu0 %v726
        %748 = vmatprep.subr.mxu0 0.0
        %749 = vmatpush1.msra.mxu0 %v727
        %750 = vmatprep.subr.mxu0 0.0
        %751 = vmatpush1.msra.mxu0 %v728
        %752 = vmatprep.subr.mxu0 0.0
        %753 = vmatpush1.msra.mxu0 %v729
        %754 = vmatprep.subr.mxu0 0.0
        %755 = vmatpush1.msra.mxu0 %v730
        %756 = vmatprep.subr.mxu0 0.0
        %757 = vmatpush1.msra.mxu0 %v731
        %758 = vmatprep.subr.mxu0 0.0
        %759 = vmatpush1.msra.mxu0 %v732
        %760 = vmatprep.subr.mxu0 0.0
        %761 = vmatpush1.msra.mxu0 %v733
        %762 = vmatprep.subr.mxu0 0.0
        %763 = vmatpush1.msra.mxu0 %v734
        %764 = vmatprep.subr.mxu0 0.0
        %765 = vmatpush1.msra.mxu0 %v735
        %766 = vmatprep.subr.mxu0 0.0
        %767 = vmatpush1.msra.mxu0 %v736
        %768 = vmatprep.subr.mxu0 0.0
        %769 = vmatpush1.msra.mxu0 %v737
        %770 = vmatprep.subr.mxu0 0.0
        %771 = vmatpush1.msra.mxu0 0.0
        %772 = vmatprep.subr.mxu0 0.0
        %773 = vmatpush1.msra.mxu0 0.0
        %774 = vmatprep.subr.mxu0 0.0
        %775 = vmatpush1.msra.mxu0 0.0
        %776 = vmatprep.subr.mxu0 0.0
        %777 = vmatpush1.msra.mxu0 0.0
        %778 = vmatprep.subr.mxu0 0.0
        %779 = vmatpush1.msra.mxu0 0.0
        %780 = vmatprep.subr.mxu0 0.0
        %781 = vmatpush1.msra.mxu0 0.0
        %782 = vmatprep.subr.mxu0 0.0
        %783 = vmatpush1.msra.mxu0 0.0
        %784 = vmatprep.subr.mxu0 0.0
        %785 = vmatpush1.msra.mxu0 0.0
        %786 = vmatprep.subr.mxu0 0.0
        %787 = vmatpush1.msra.mxu0 0.0
        %788 = vmatprep.subr.mxu0 0.0
        %789 = vmatpush1.msra.mxu0 0.0
        %790 = vmatprep.subr.mxu0 0.0
        %791 = vmatpush1.msra.mxu0 0.0
        %792 = vmatprep.subr.mxu0 0.0
        %793 = vmatpush1.msra.mxu0 0.0
        %794 = vmatprep.subr.mxu0 0.0
        %795 = vmatpush1.msra.mxu0 0.0
        %796 = vmatprep.subr.mxu0 0.0
        %797 = vmatpush1.msra.mxu0 0.0
        %798 = vmatprep.subr.mxu0 0.0
        %799 = vmatpush1.msra.mxu0 0.0
        %800 = vmatprep.subr.mxu0 0.0
        %801 = vmatpush1.msra.mxu0 0.0
        %802 = vmatprep.mubr.f32.mxu0 0.0
        %803 = vmatmul.mubr.f32.gmra.mrb[0].mxu0 %v719
        %v804 = vpop.f32.mrb[0].mxu0
        %v805 = vadd.f32 0.0, %v804
        %v806 = vpop.f32.mrb[0].mxu0
        %807 = vmatprep.mubr.f32.mxu0 0.0
        %808 = vmatmul.mubr.f32.gmra.mrb[0].mxu0 %v720
        %v809 = vpop.f32.mrb[0].mxu0
        %v810 = vadd.f32 0.0, %v809
        %v811 = vpop.f32.mrb[0].mxu0
        %812 = vdwg.mxu0
        %v813 = vadd.f32 %v711, %v805
        %v814 = vadd.f32 %v716, %v810
        %s815 = scalar_lea.vmem [#allocation8], 1
        %v816 = vld [vmem:[%s815] sm:$0x1]
        %v818 = vlaneseq
        %v819 = vshrl.u32 %v818, 7
        %v820 = vsub.s32 0, %v819
        %v821 = vrot.slane %v816, %v820
        %v823 = vadd.f32 %v813, %v821
        %v824 = vadd.f32 %v814, %v821
        %v825 = vadd.f32 %v221, %v823
        %v826 = vadd.f32 %v222, %v824
        %vm827 = vcmp.gt.f32.partialorder %v825, 0.0
        %vm828 = vcmp.gt.f32.partialorder %v826, 0.0
        %v829 = vmul.f32 %v825, 0.1
        %v830 = vmul.f32 %v826, 0.1
        %v831 = vsel %vm827, %v825, %v829
        %v832 = vsel %vm828, %v826, %v830
        %833 = vst [vmem:[#allocation2 + $0x5] sm:$0xff] %v831
        %834 = vst [vmem:[#allocation2 + $0xd] sm:$0xff] %v832
        %v835 = vld [vmem:[#allocation2 + $0x2] sm:$0xff]
        %v836 = vld [vmem:[#allocation2 + $0xa] sm:$0xff]
        %s837 = scalar_lea.vmem [#allocation6], 768
        %v838 = vld [vmem:[%s837] sm:$0xff]
        %v839 = vld [vmem:[%s837 + $0x8] sm:$0xff]
        %v840 = vld [vmem:[%s837 + $0x10] sm:$0xff]
        %v841 = vld [vmem:[%s837 + $0x18] sm:$0xff]
        %v842 = vld [vmem:[%s837 + $0x20] sm:$0xff]
        %v843 = vld [vmem:[%s837 + $0x28] sm:$0xff]
        %v844 = vld [vmem:[%s837 + $0x30] sm:$0xff]
        %v845 = vld [vmem:[%s837 + $0x38] sm:$0xff]
        %v846 = vld [vmem:[%s837 + $0x40] sm:$0xff]
        %v847 = vld [vmem:[%s837 + $0x48] sm:$0xff]
        %v848 = vld [vmem:[%s837 + $0x50] sm:$0xff]
        %v849 = vld [vmem:[%s837 + $0x58] sm:$0xff]
        %v850 = vld [vmem:[%s837 + $0x60] sm:$0xff]
        %v851 = vld [vmem:[%s837 + $0x68] sm:$0xff]
        %v852 = vld [vmem:[%s837 + $0x70] sm:$0xff]
        %v853 = vld [vmem:[%s837 + $0x78] sm:$0xff]
        %v854 = vld [vmem:[#allocation2 + $0x5] sm:$0xff]
        %v855 = vld [vmem:[#allocation2 + $0xd] sm:$0xff]
        %s856 = scalar_lea.vmem [#allocation6], 896
        %v857 = vld [vmem:[%s856] sm:$0xff]
        %v858 = vld [vmem:[%s856 + $0x8] sm:$0xff]
        %v859 = vld [vmem:[%s856 + $0x10] sm:$0xff]
        %v860 = vld [vmem:[%s856 + $0x18] sm:$0xff]
        %v861 = vld [vmem:[%s856 + $0x20] sm:$0xff]
        %v862 = vld [vmem:[%s856 + $0x28] sm:$0xff]
        %v863 = vld [vmem:[%s856 + $0x30] sm:$0xff]
        %v864 = vld [vmem:[%s856 + $0x38] sm:$0xff]
        %v865 = vld [vmem:[%s856 + $0x40] sm:$0xff]
        %v866 = vld [vmem:[%s856 + $0x48] sm:$0xff]
        %v867 = vld [vmem:[%s856 + $0x50] sm:$0xff]
        %v868 = vld [vmem:[%s856 + $0x58] sm:$0xff]
        %v869 = vld [vmem:[%s856 + $0x60] sm:$0xff]
        %v870 = vld [vmem:[%s856 + $0x68] sm:$0xff]
        %v871 = vld [vmem:[%s856 + $0x70] sm:$0xff]
        %v872 = vld [vmem:[%s856 + $0x78] sm:$0xff]
        %873 = vmatprep.subr.mxu0 0.0
        %874 = vmatpush1.msra.mxu0 %v857
        %875 = vmatprep.subr.mxu0 0.0
        %876 = vmatpush1.msra.mxu0 %v858
        %877 = vmatprep.subr.mxu0 0.0
        %878 = vmatpush1.msra.mxu0 %v859
        %879 = vmatprep.subr.mxu0 0.0
        %880 = vmatpush1.msra.mxu0 %v860
        %881 = vmatprep.subr.mxu0 0.0
        %882 = vmatpush1.msra.mxu0 %v861
        %883 = vmatprep.subr.mxu0 0.0
        %884 = vmatpush1.msra.mxu0 %v862
        %885 = vmatprep.subr.mxu0 0.0
        %886 = vmatpush1.msra.mxu0 %v863
        %887 = vmatprep.subr.mxu0 0.0
        %888 = vmatpush1.msra.mxu0 %v864
        %889 = vmatprep.subr.mxu0 0.0
        %890 = vmatpush1.msra.mxu0 %v865
        %891 = vmatprep.subr.mxu0 0.0
        %892 = vmatpush1.msra.mxu0 %v866
        %893 = vmatprep.subr.mxu0 0.0
        %894 = vmatpush1.msra.mxu0 %v867
        %895 = vmatprep.subr.mxu0 0.0
        %896 = vmatpush1.msra.mxu0 %v868
        %897 = vmatprep.subr.mxu0 0.0
        %898 = vmatpush1.msra.mxu0 %v869
        %899 = vmatprep.subr.mxu0 0.0
        %900 = vmatpush1.msra.mxu0 %v870
        %901 = vmatprep.subr.mxu0 0.0
        %902 = vmatpush1.msra.mxu0 %v871
        %903 = vmatprep.subr.mxu0 0.0
        %904 = vmatpush1.msra.mxu0 %v872
        %905 = vmatprep.subr.mxu0 0.0
        %906 = vmatpush1.msra.mxu0 0.0
        %907 = vmatprep.subr.mxu0 0.0
        %908 = vmatpush1.msra.mxu0 0.0
        %909 = vmatprep.subr.mxu0 0.0
        %910 = vmatpush1.msra.mxu0 0.0
        %911 = vmatprep.subr.mxu0 0.0
        %912 = vmatpush1.msra.mxu0 0.0
        %913 = vmatprep.subr.mxu0 0.0
        %914 = vmatpush1.msra.mxu0 0.0
        %915 = vmatprep.subr.mxu0 0.0
        %916 = vmatpush1.msra.mxu0 0.0
        %917 = vmatprep.subr.mxu0 0.0
        %918 = vmatpush1.msra.mxu0 0.0
        %919 = vmatprep.subr.mxu0 0.0
        %920 = vmatpush1.msra.mxu0 0.0
        %921 = vmatprep.subr.mxu0 0.0
        %922 = vmatpush1.msra.mxu0 0.0
        %923 = vmatprep.subr.mxu0 0.0
        %924 = vmatpush1.msra.mxu0 0.0
        %925 = vmatprep.subr.mxu0 0.0
        %926 = vmatpush1.msra.mxu0 0.0
        %927 = vmatprep.subr.mxu0 0.0
        %928 = vmatpush1.msra.mxu0 0.0
        %929 = vmatprep.subr.mxu0 0.0
        %930 = vmatpush1.msra.mxu0 0.0
        %931 = vmatprep.subr.mxu0 0.0
        %932 = vmatpush1.msra.mxu0 0.0
        %933 = vmatprep.subr.mxu0 0.0
        %934 = vmatpush1.msra.mxu0 0.0
        %935 = vmatprep.subr.mxu0 0.0
        %936 = vmatpush1.msra.mxu0 0.0
        %937 = vmatprep.mubr.f32.mxu0 0.0
        %938 = vmatmul.mubr.f32.gmra.mrb[0].mxu0 %v854
        %v939 = vpop.f32.mrb[0].mxu0
        %v940 = vadd.f32 0.0, %v939
        %v941 = vpop.f32.mrb[0].mxu0
        %942 = vmatprep.mubr.f32.mxu0 0.0
        %943 = vmatmul.mubr.f32.gmra.mrb[0].mxu0 %v855
        %v944 = vpop.f32.mrb[0].mxu0
        %v945 = vadd.f32 0.0, %v944
        %v946 = vpop.f32.mrb[0].mxu0
        %947 = vdwg.mxu0
        %948 = vmatprep.subr.mxu0 0.0
        %949 = vmatpush1.msra.mxu0 %v838
        %950 = vmatprep.subr.mxu0 0.0
        %951 = vmatpush1.msra.mxu0 %v839
        %952 = vmatprep.subr.mxu0 0.0
        %953 = vmatpush1.msra.mxu0 %v840
        %954 = vmatprep.subr.mxu0 0.0
        %955 = vmatpush1.msra.mxu0 %v841
        %956 = vmatprep.subr.mxu0 0.0
        %957 = vmatpush1.msra.mxu0 %v842
        %958 = vmatprep.subr.mxu0 0.0
        %959 = vmatpush1.msra.mxu0 %v843
        %960 = vmatprep.subr.mxu0 0.0
        %961 = vmatpush1.msra.mxu0 %v844
        %962 = vmatprep.subr.mxu0 0.0
        %963 = vmatpush1.msra.mxu0 %v845
        %964 = vmatprep.subr.mxu0 0.0
        %965 = vmatpush1.msra.mxu0 %v846
        %966 = vmatprep.subr.mxu0 0.0
        %967 = vmatpush1.msra.mxu0 %v847
        %968 = vmatprep.subr.mxu0 0.0
        %969 = vmatpush1.msra.mxu0 %v848
        %970 = vmatprep.subr.mxu0 0.0
        %971 = vmatpush1.msra.mxu0 %v849
        %972 = vmatprep.subr.mxu0 0.0
        %973 = vmatpush1.msra.mxu0 %v850
        %974 = vmatprep.subr.mxu0 0.0
        %975 = vmatpush1.msra.mxu0 %v851
        %976 = vmatprep.subr.mxu0 0.0
        %977 = vmatpush1.msra.mxu0 %v852
        %978 = vmatprep.subr.mxu0 0.0
        %979 = vmatpush1.msra.mxu0 %v853
        %980 = vmatprep.subr.mxu0 0.0
        %981 = vmatpush1.msra.mxu0 0.0
        %982 = vmatprep.subr.mxu0 0.0
        %983 = vmatpush1.msra.mxu0 0.0
        %984 = vmatprep.subr.mxu0 0.0
        %985 = vmatpush1.msra.mxu0 0.0
        %986 = vmatprep.subr.mxu0 0.0
        %987 = vmatpush1.msra.mxu0 0.0
        %988 = vmatprep.subr.mxu0 0.0
        %989 = vmatpush1.msra.mxu0 0.0
        %990 = vmatprep.subr.mxu0 0.0
        %991 = vmatpush1.msra.mxu0 0.0
        %992 = vmatprep.subr.mxu0 0.0
        %993 = vmatpush1.msra.mxu0 0.0
        %994 = vmatprep.subr.mxu0 0.0
        %995 = vmatpush1.msra.mxu0 0.0
        %996 = vmatprep.subr.mxu0 0.0
        %997 = vmatpush1.msra.mxu0 0.0
        %998 = vmatprep.subr.mxu0 0.0
        %999 = vmatpush1.msra.mxu0 0.0
        %1000 = vmatprep.subr.mxu0 0.0
        %1001 = vmatpush1.msra.mxu0 0.0
        %1002 = vmatprep.subr.mxu0 0.0
        %1003 = vmatpush1.msra.mxu0 0.0
        %1004 = vmatprep.subr.mxu0 0.0
        %1005 = vmatpush1.msra.mxu0 0.0
        %1006 = vmatprep.subr.mxu0 0.0
        %1007 = vmatpush1.msra.mxu0 0.0
        %1008 = vmatprep.subr.mxu0 0.0
        %1009 = vmatpush1.msra.mxu0 0.0
        %1010 = vmatprep.subr.mxu0 0.0
        %1011 = vmatpush1.msra.mxu0 0.0
        %1012 = vmatprep.mubr.f32.mxu0 0.0
        %1013 = vmatmul.mubr.f32.gmra.mrb[0].mxu0 %v835
        %v1014 = vpop.f32.mrb[0].mxu0
        %v1015 = vadd.f32 %v940, %v1014
        %v1016 = vpop.f32.mrb[0].mxu0
        %1017 = vmatprep.mubr.f32.mxu0 0.0
        %1018 = vmatmul.mubr.f32.gmra.mrb[0].mxu0 %v836
        %v1019 = vpop.f32.mrb[0].mxu0
        %v1020 = vadd.f32 %v945, %v1019
        %v1021 = vpop.f32.mrb[0].mxu0
        %1022 = vdwg.mxu0
        %v1023 = vld [vmem:[#allocation2 + $0x8] sm:$0xff]
        %v1024 = vld [vmem:[#allocation2 + $0x10] sm:$0xff]
        %s1025 = scalar_lea.vmem [#allocation6], 1024
        %v1026 = vld [vmem:[%s1025] sm:$0xff]
        %v1027 = vld [vmem:[%s1025 + $0x8] sm:$0xff]
        %v1028 = vld [vmem:[%s1025 + $0x10] sm:$0xff]
        %v1029 = vld [vmem:[%s1025 + $0x18] sm:$0xff]
        %v1030 = vld [vmem:[%s1025 + $0x20] sm:$0xff]
        %v1031 = vld [vmem:[%s1025 + $0x28] sm:$0xff]
        %v1032 = vld [vmem:[%s1025 + $0x30] sm:$0xff]
        %v1033 = vld [vmem:[%s1025 + $0x38] sm:$0xff]
        %v1034 = vld [vmem:[%s1025 + $0x40] sm:$0xff]
        %v1035 = vld [vmem:[%s1025 + $0x48] sm:$0xff]
        %v1036 = vld [vmem:[%s1025 + $0x50] sm:$0xff]
        %v1037 = vld [vmem:[%s1025 + $0x58] sm:$0xff]
        %v1038 = vld [vmem:[%s1025 + $0x60] sm:$0xff]
        %v1039 = vld [vmem:[%s1025 + $0x68] sm:$0xff]
        %v1040 = vld [vmem:[%s1025 + $0x70] sm:$0xff]
        %v1041 = vld [vmem:[%s1025 + $0x78] sm:$0xff]
        %1042 = vmatprep.subr.mxu0 0.0
        %1043 = vmatpush1.msra.mxu0 %v1026
        %1044 = vmatprep.subr.mxu0 0.0
        %1045 = vmatpush1.msra.mxu0 %v1027
        %1046 = vmatprep.subr.mxu0 0.0
        %1047 = vmatpush1.msra.mxu0 %v1028
        %1048 = vmatprep.subr.mxu0 0.0
        %1049 = vmatpush1.msra.mxu0 %v1029
        %1050 = vmatprep.subr.mxu0 0.0
        %1051 = vmatpush1.msra.mxu0 %v1030
        %1052 = vmatprep.subr.mxu0 0.0
        %1053 = vmatpush1.msra.mxu0 %v1031
        %1054 = vmatprep.subr.mxu0 0.0
        %1055 = vmatpush1.msra.mxu0 %v1032
        %1056 = vmatprep.subr.mxu0 0.0
        %1057 = vmatpush1.msra.mxu0 %v1033
        %1058 = vmatprep.subr.mxu0 0.0
        %1059 = vmatpush1.msra.mxu0 %v1034
        %1060 = vmatprep.subr.mxu0 0.0
        %1061 = vmatpush1.msra.mxu0 %v1035
        %1062 = vmatprep.subr.mxu0 0.0
        %1063 = vmatpush1.msra.mxu0 %v1036
        %1064 = vmatprep.subr.mxu0 0.0
        %1065 = vmatpush1.msra.mxu0 %v1037
        %1066 = vmatprep.subr.mxu0 0.0
        %1067 = vmatpush1.msra.mxu0 %v1038
        %1068 = vmatprep.subr.mxu0 0.0
        %1069 = vmatpush1.msra.mxu0 %v1039
        %1070 = vmatprep.subr.mxu0 0.0
        %1071 = vmatpush1.msra.mxu0 %v1040
        %1072 = vmatprep.subr.mxu0 0.0
        %1073 = vmatpush1.msra.mxu0 %v1041
        %1074 = vmatprep.subr.mxu0 0.0
        %1075 = vmatpush1.msra.mxu0 0.0
        %1076 = vmatprep.subr.mxu0 0.0
        %1077 = vmatpush1.msra.mxu0 0.0
        %1078 = vmatprep.subr.mxu0 0.0
        %1079 = vmatpush1.msra.mxu0 0.0
        %1080 = vmatprep.subr.mxu0 0.0
        %1081 = vmatpush1.msra.mxu0 0.0
        %1082 = vmatprep.subr.mxu0 0.0
        %1083 = vmatpush1.msra.mxu0 0.0
        %1084 = vmatprep.subr.mxu0 0.0
        %1085 = vmatpush1.msra.mxu0 0.0
        %1086 = vmatprep.subr.mxu0 0.0
        %1087 = vmatpush1.msra.mxu0 0.0
        %1088 = vmatprep.subr.mxu0 0.0
        %1089 = vmatpush1.msra.mxu0 0.0
        %1090 = vmatprep.subr.mxu0 0.0
        %1091 = vmatpush1.msra.mxu0 0.0
        %1092 = vmatprep.subr.mxu0 0.0
        %1093 = vmatpush1.msra.mxu0 0.0
        %1094 = vmatprep.subr.mxu0 0.0
        %1095 = vmatpush1.msra.mxu0 0.0
        %1096 = vmatprep.subr.mxu0 0.0
        %1097 = vmatpush1.msra.mxu0 0.0
        %1098 = vmatprep.subr.mxu0 0.0
        %1099 = vmatpush1.msra.mxu0 0.0
        %1100 = vmatprep.subr.mxu0 0.0
        %1101 = vmatpush1.msra.mxu0 0.0
        %1102 = vmatprep.subr.mxu0 0.0
        %1103 = vmatpush1.msra.mxu0 0.0
        %1104 = vmatprep.subr.mxu0 0.0
        %1105 = vmatpush1.msra.mxu0 0.0
        %1106 = vmatprep.mubr.f32.mxu0 0.0
        %1107 = vmatmul.mubr.f32.gmra.mrb[0].mxu0 %v1023
        %v1108 = vpop.f32.mrb[0].mxu0
        %v1109 = vadd.f32 0.0, %v1108
        %v1110 = vpop.f32.mrb[0].mxu0
        %1111 = vmatprep.mubr.f32.mxu0 0.0
        %1112 = vmatmul.mubr.f32.gmra.mrb[0].mxu0 %v1024
        %v1113 = vpop.f32.mrb[0].mxu0
        %v1114 = vadd.f32 0.0, %v1113
        %v1115 = vpop.f32.mrb[0].mxu0
        %1116 = vdwg.mxu0
        %v1117 = vadd.f32 %v1015, %v1109
        %v1118 = vadd.f32 %v1020, %v1114
        %s1119 = scalar_lea.vmem [#allocation8], 2
        %v1120 = vld [vmem:[%s1119] sm:$0x1]
        %v1122 = vlaneseq
        %v1123 = vshrl.u32 %v1122, 7
        %v1124 = vsub.s32 0, %v1123
        %v1125 = vrot.slane %v1120, %v1124
        %v1127 = vadd.f32 %v1117, %v1125
        %v1128 = vadd.f32 %v1118, %v1125
        %vm1129 = vcmp.gt.f32.partialorder %v1127, 0.0
        %vm1130 = vcmp.gt.f32.partialorder %v1128, 0.0
        %v1131 = vmul.f32 %v1127, 0.1
        %v1132 = vmul.f32 %v1128, 0.1
        %v1133 = vsel %vm1129, %v1127, %v1131
        %v1134 = vsel %vm1130, %v1128, %v1132
        %1135 = vst [vmem:[#allocation2 + $0x5] sm:$0xff] %v1133
        %1136 = vst [vmem:[#allocation2 + $0xd] sm:$0xff] %v1134
        %v1137 = vld [vmem:[#allocation2 + $0x4] sm:$0xff]
        %v1138 = vld [vmem:[#allocation2 + $0xc] sm:$0xff]
        %s1139 = scalar_lea.vmem [#allocation6], 1152
        %v1140 = vld [vmem:[%s1139] sm:$0xff]
        %v1141 = vld [vmem:[%s1139 + $0x8] sm:$0xff]
        %v1142 = vld [vmem:[%s1139 + $0x10] sm:$0xff]
        %v1143 = vld [vmem:[%s1139 + $0x18] sm:$0xff]
        %v1144 = vld [vmem:[%s1139 + $0x20] sm:$0xff]
        %v1145 = vld [vmem:[%s1139 + $0x28] sm:$0xff]
        %v1146 = vld [vmem:[%s1139 + $0x30] sm:$0xff]
        %v1147 = vld [vmem:[%s1139 + $0x38] sm:$0xff]
        %v1148 = vld [vmem:[%s1139 + $0x40] sm:$0xff]
        %v1149 = vld [vmem:[%s1139 + $0x48] sm:$0xff]
        %v1150 = vld [vmem:[%s1139 + $0x50] sm:$0xff]
        %v1151 = vld [vmem:[%s1139 + $0x58] sm:$0xff]
        %v1152 = vld [vmem:[%s1139 + $0x60] sm:$0xff]
        %v1153 = vld [vmem:[%s1139 + $0x68] sm:$0xff]
        %v1154 = vld [vmem:[%s1139 + $0x70] sm:$0xff]
        %v1155 = vld [vmem:[%s1139 + $0x78] sm:$0xff]
        %v1156 = vld [vmem:[#allocation2 + $0x5] sm:$0xff]
        %v1157 = vld [vmem:[#allocation2 + $0xd] sm:$0xff]
        %s1158 = scalar_lea.vmem [#allocation6], 1280
        %v1159 = vld [vmem:[%s1158] sm:$0xff]
        %v1160 = vld [vmem:[%s1158 + $0x8] sm:$0xff]
        %v1161 = vld [vmem:[%s1158 + $0x10] sm:$0xff]
        %v1162 = vld [vmem:[%s1158 + $0x18] sm:$0xff]
        %v1163 = vld [vmem:[%s1158 + $0x20] sm:$0xff]
        %v1164 = vld [vmem:[%s1158 + $0x28] sm:$0xff]
        %v1165 = vld [vmem:[%s1158 + $0x30] sm:$0xff]
        %v1166 = vld [vmem:[%s1158 + $0x38] sm:$0xff]
        %v1167 = vld [vmem:[%s1158 + $0x40] sm:$0xff]
        %v1168 = vld [vmem:[%s1158 + $0x48] sm:$0xff]
        %v1169 = vld [vmem:[%s1158 + $0x50] sm:$0xff]
        %v1170 = vld [vmem:[%s1158 + $0x58] sm:$0xff]
        %v1171 = vld [vmem:[%s1158 + $0x60] sm:$0xff]
        %v1172 = vld [vmem:[%s1158 + $0x68] sm:$0xff]
        %v1173 = vld [vmem:[%s1158 + $0x70] sm:$0xff]
        %v1174 = vld [vmem:[%s1158 + $0x78] sm:$0xff]
        %1175 = vmatprep.subr.mxu0 0.0
        %1176 = vmatpush1.msra.mxu0 %v1159
        %1177 = vmatprep.subr.mxu0 0.0
        %1178 = vmatpush1.msra.mxu0 %v1160
        %1179 = vmatprep.subr.mxu0 0.0
        %1180 = vmatpush1.msra.mxu0 %v1161
        %1181 = vmatprep.subr.mxu0 0.0
        %1182 = vmatpush1.msra.mxu0 %v1162
        %1183 = vmatprep.subr.mxu0 0.0
        %1184 = vmatpush1.msra.mxu0 %v1163
        %1185 = vmatprep.subr.mxu0 0.0
        %1186 = vmatpush1.msra.mxu0 %v1164
        %1187 = vmatprep.subr.mxu0 0.0
        %1188 = vmatpush1.msra.mxu0 %v1165
        %1189 = vmatprep.subr.mxu0 0.0
        %1190 = vmatpush1.msra.mxu0 %v1166
        %1191 = vmatprep.subr.mxu0 0.0
        %1192 = vmatpush1.msra.mxu0 %v1167
        %1193 = vmatprep.subr.mxu0 0.0
        %1194 = vmatpush1.msra.mxu0 %v1168
        %1195 = vmatprep.subr.mxu0 0.0
        %1196 = vmatpush1.msra.mxu0 %v1169
        %1197 = vmatprep.subr.mxu0 0.0
        %1198 = vmatpush1.msra.mxu0 %v1170
        %1199 = vmatprep.subr.mxu0 0.0
        %1200 = vmatpush1.msra.mxu0 %v1171
        %1201 = vmatprep.subr.mxu0 0.0
        %1202 = vmatpush1.msra.mxu0 %v1172
        %1203 = vmatprep.subr.mxu0 0.0
        %1204 = vmatpush1.msra.mxu0 %v1173
        %1205 = vmatprep.subr.mxu0 0.0
        %1206 = vmatpush1.msra.mxu0 %v1174
        %1207 = vmatprep.subr.mxu0 0.0
        %1208 = vmatpush1.msra.mxu0 0.0
        %1209 = vmatprep.subr.mxu0 0.0
        %1210 = vmatpush1.msra.mxu0 0.0
        %1211 = vmatprep.subr.mxu0 0.0
        %1212 = vmatpush1.msra.mxu0 0.0
        %1213 = vmatprep.subr.mxu0 0.0
        %1214 = vmatpush1.msra.mxu0 0.0
        %1215 = vmatprep.subr.mxu0 0.0
        %1216 = vmatpush1.msra.mxu0 0.0
        %1217 = vmatprep.subr.mxu0 0.0
        %1218 = vmatpush1.msra.mxu0 0.0
        %1219 = vmatprep.subr.mxu0 0.0
        %1220 = vmatpush1.msra.mxu0 0.0
        %1221 = vmatprep.subr.mxu0 0.0
        %1222 = vmatpush1.msra.mxu0 0.0
        %1223 = vmatprep.subr.mxu0 0.0
        %1224 = vmatpush1.msra.mxu0 0.0
        %1225 = vmatprep.subr.mxu0 0.0
        %1226 = vmatpush1.msra.mxu0 0.0
        %1227 = vmatprep.subr.mxu0 0.0
        %1228 = vmatpush1.msra.mxu0 0.0
        %1229 = vmatprep.subr.mxu0 0.0
        %1230 = vmatpush1.msra.mxu0 0.0
        %1231 = vmatprep.subr.mxu0 0.0
        %1232 = vmatpush1.msra.mxu0 0.0
        %1233 = vmatprep.subr.mxu0 0.0
        %1234 = vmatpush1.msra.mxu0 0.0
        %1235 = vmatprep.subr.mxu0 0.0
        %1236 = vmatpush1.msra.mxu0 0.0
        %1237 = vmatprep.subr.mxu0 0.0
        %1238 = vmatpush1.msra.mxu0 0.0
        %1239 = vmatprep.mubr.f32.mxu0 0.0
        %1240 = vmatmul.mubr.f32.gmra.mrb[0].mxu0 %v1156
        %v1241 = vpop.f32.mrb[0].mxu0
        %v1242 = vadd.f32 0.0, %v1241
        %v1243 = vpop.f32.mrb[0].mxu0
        %1244 = vmatprep.mubr.f32.mxu0 0.0
        %1245 = vmatmul.mubr.f32.gmra.mrb[0].mxu0 %v1157
        %v1246 = vpop.f32.mrb[0].mxu0
        %v1247 = vadd.f32 0.0, %v1246
        %v1248 = vpop.f32.mrb[0].mxu0
        %1249 = vdwg.mxu0
        %1250 = vmatprep.subr.mxu0 0.0
        %1251 = vmatpush1.msra.mxu0 %v1140
        %1252 = vmatprep.subr.mxu0 0.0
        %1253 = vmatpush1.msra.mxu0 %v1141
        %1254 = vmatprep.subr.mxu0 0.0
        %1255 = vmatpush1.msra.mxu0 %v1142
        %1256 = vmatprep.subr.mxu0 0.0
        %1257 = vmatpush1.msra.mxu0 %v1143
        %1258 = vmatprep.subr.mxu0 0.0
        %1259 = vmatpush1.msra.mxu0 %v1144
        %1260 = vmatprep.subr.mxu0 0.0
        %1261 = vmatpush1.msra.mxu0 %v1145
        %1262 = vmatprep.subr.mxu0 0.0
        %1263 = vmatpush1.msra.mxu0 %v1146
        %1264 = vmatprep.subr.mxu0 0.0
        %1265 = vmatpush1.msra.mxu0 %v1147
        %1266 = vmatprep.subr.mxu0 0.0
        %1267 = vmatpush1.msra.mxu0 %v1148
        %1268 = vmatprep.subr.mxu0 0.0
        %1269 = vmatpush1.msra.mxu0 %v1149
        %1270 = vmatprep.subr.mxu0 0.0
        %1271 = vmatpush1.msra.mxu0 %v1150
        %1272 = vmatprep.subr.mxu0 0.0
        %1273 = vmatpush1.msra.mxu0 %v1151
        %1274 = vmatprep.subr.mxu0 0.0
        %1275 = vmatpush1.msra.mxu0 %v1152
        %1276 = vmatprep.subr.mxu0 0.0
        %1277 = vmatpush1.msra.mxu0 %v1153
        %1278 = vmatprep.subr.mxu0 0.0
        %1279 = vmatpush1.msra.mxu0 %v1154
        %1280 = vmatprep.subr.mxu0 0.0
        %1281 = vmatpush1.msra.mxu0 %v1155
        %1282 = vmatprep.subr.mxu0 0.0
        %1283 = vmatpush1.msra.mxu0 0.0
        %1284 = vmatprep.subr.mxu0 0.0
        %1285 = vmatpush1.msra.mxu0 0.0
        %1286 = vmatprep.subr.mxu0 0.0
        %1287 = vmatpush1.msra.mxu0 0.0
        %1288 = vmatprep.subr.mxu0 0.0
        %1289 = vmatpush1.msra.mxu0 0.0
        %1290 = vmatprep.subr.mxu0 0.0
        %1291 = vmatpush1.msra.mxu0 0.0
        %1292 = vmatprep.subr.mxu0 0.0
        %1293 = vmatpush1.msra.mxu0 0.0
        %1294 = vmatprep.subr.mxu0 0.0
        %1295 = vmatpush1.msra.mxu0 0.0
        %1296 = vmatprep.subr.mxu0 0.0
        %1297 = vmatpush1.msra.mxu0 0.0
        %1298 = vmatprep.subr.mxu0 0.0
        %1299 = vmatpush1.msra.mxu0 0.0
        %1300 = vmatprep.subr.mxu0 0.0
        %1301 = vmatpush1.msra.mxu0 0.0
        %1302 = vmatprep.subr.mxu0 0.0
        %1303 = vmatpush1.msra.mxu0 0.0
        %1304 = vmatprep.subr.mxu0 0.0
        %1305 = vmatpush1.msra.mxu0 0.0
        %1306 = vmatprep.subr.mxu0 0.0
        %1307 = vmatpush1.msra.mxu0 0.0
        %1308 = vmatprep.subr.mxu0 0.0
        %1309 = vmatpush1.msra.mxu0 0.0
        %1310 = vmatprep.subr.mxu0 0.0
        %1311 = vmatpush1.msra.mxu0 0.0
        %1312 = vmatprep.subr.mxu0 0.0
        %1313 = vmatpush1.msra.mxu0 0.0
        %1314 = vmatprep.mubr.f32.mxu0 0.0
        %1315 = vmatmul.mubr.f32.gmra.mrb[0].mxu0 %v1137
        %v1316 = vpop.f32.mrb[0].mxu0
        %v1317 = vadd.f32 %v1242, %v1316
        %v1318 = vpop.f32.mrb[0].mxu0
        %1319 = vmatprep.mubr.f32.mxu0 0.0
        %1320 = vmatmul.mubr.f32.gmra.mrb[0].mxu0 %v1138
        %v1321 = vpop.f32.mrb[0].mxu0
        %v1322 = vadd.f32 %v1247, %v1321
        %v1323 = vpop.f32.mrb[0].mxu0
        %1324 = vdwg.mxu0
        %v1325 = vld [vmem:[#allocation2 + $0x6] sm:$0xff]
        %v1326 = vld [vmem:[#allocation2 + $0xe] sm:$0xff]
        %s1327 = scalar_lea.vmem [#allocation6], 1408
        %v1328 = vld [vmem:[%s1327] sm:$0xff]
        %v1329 = vld [vmem:[%s1327 + $0x8] sm:$0xff]
        %v1330 = vld [vmem:[%s1327 + $0x10] sm:$0xff]
        %v1331 = vld [vmem:[%s1327 + $0x18] sm:$0xff]
        %v1332 = vld [vmem:[%s1327 + $0x20] sm:$0xff]
        %v1333 = vld [vmem:[%s1327 + $0x28] sm:$0xff]
        %v1334 = vld [vmem:[%s1327 + $0x30] sm:$0xff]
        %v1335 = vld [vmem:[%s1327 + $0x38] sm:$0xff]
        %v1336 = vld [vmem:[%s1327 + $0x40] sm:$0xff]
        %v1337 = vld [vmem:[%s1327 + $0x48] sm:$0xff]
        %v1338 = vld [vmem:[%s1327 + $0x50] sm:$0xff]
        %v1339 = vld [vmem:[%s1327 + $0x58] sm:$0xff]
        %v1340 = vld [vmem:[%s1327 + $0x60] sm:$0xff]
        %v1341 = vld [vmem:[%s1327 + $0x68] sm:$0xff]
        %v1342 = vld [vmem:[%s1327 + $0x70] sm:$0xff]
        %v1343 = vld [vmem:[%s1327 + $0x78] sm:$0xff]
        %1344 = vmatprep.subr.mxu0 0.0
        %1345 = vmatpush1.msra.mxu0 %v1328
        %1346 = vmatprep.subr.mxu0 0.0
        %1347 = vmatpush1.msra.mxu0 %v1329
        %1348 = vmatprep.subr.mxu0 0.0
        %1349 = vmatpush1.msra.mxu0 %v1330
        %1350 = vmatprep.subr.mxu0 0.0
        %1351 = vmatpush1.msra.mxu0 %v1331
        %1352 = vmatprep.subr.mxu0 0.0
        %1353 = vmatpush1.msra.mxu0 %v1332
        %1354 = vmatprep.subr.mxu0 0.0
        %1355 = vmatpush1.msra.mxu0 %v1333
        %1356 = vmatprep.subr.mxu0 0.0
        %1357 = vmatpush1.msra.mxu0 %v1334
        %1358 = vmatprep.subr.mxu0 0.0
        %1359 = vmatpush1.msra.mxu0 %v1335
        %1360 = vmatprep.subr.mxu0 0.0
        %1361 = vmatpush1.msra.mxu0 %v1336
        %1362 = vmatprep.subr.mxu0 0.0
        %1363 = vmatpush1.msra.mxu0 %v1337
        %1364 = vmatprep.subr.mxu0 0.0
        %1365 = vmatpush1.msra.mxu0 %v1338
        %1366 = vmatprep.subr.mxu0 0.0
        %1367 = vmatpush1.msra.mxu0 %v1339
        %1368 = vmatprep.subr.mxu0 0.0
        %1369 = vmatpush1.msra.mxu0 %v1340
        %1370 = vmatprep.subr.mxu0 0.0
        %1371 = vmatpush1.msra.mxu0 %v1341
        %1372 = vmatprep.subr.mxu0 0.0
        %1373 = vmatpush1.msra.mxu0 %v1342
        %1374 = vmatprep.subr.mxu0 0.0
        %1375 = vmatpush1.msra.mxu0 %v1343
        %1376 = vmatprep.subr.mxu0 0.0
        %1377 = vmatpush1.msra.mxu0 0.0
        %1378 = vmatprep.subr.mxu0 0.0
        %1379 = vmatpush1.msra.mxu0 0.0
        %1380 = vmatprep.subr.mxu0 0.0
        %1381 = vmatpush1.msra.mxu0 0.0
        %1382 = vmatprep.subr.mxu0 0.0
        %1383 = vmatpush1.msra.mxu0 0.0
        %1384 = vmatprep.subr.mxu0 0.0
        %1385 = vmatpush1.msra.mxu0 0.0
        %1386 = vmatprep.subr.mxu0 0.0
        %1387 = vmatpush1.msra.mxu0 0.0
        %1388 = vmatprep.subr.mxu0 0.0
        %1389 = vmatpush1.msra.mxu0 0.0
        %1390 = vmatprep.subr.mxu0 0.0
        %1391 = vmatpush1.msra.mxu0 0.0
        %1392 = vmatprep.subr.mxu0 0.0
        %1393 = vmatpush1.msra.mxu0 0.0
        %1394 = vmatprep.subr.mxu0 0.0
        %1395 = vmatpush1.msra.mxu0 0.0
        %1396 = vmatprep.subr.mxu0 0.0
        %1397 = vmatpush1.msra.mxu0 0.0
        %1398 = vmatprep.subr.mxu0 0.0
        %1399 = vmatpush1.msra.mxu0 0.0
        %1400 = vmatprep.subr.mxu0 0.0
        %1401 = vmatpush1.msra.mxu0 0.0
        %1402 = vmatprep.subr.mxu0 0.0
        %1403 = vmatpush1.msra.mxu0 0.0
        %1404 = vmatprep.subr.mxu0 0.0
        %1405 = vmatpush1.msra.mxu0 0.0
        %1406 = vmatprep.subr.mxu0 0.0
        %1407 = vmatpush1.msra.mxu0 0.0
        %1408 = vmatprep.mubr.f32.mxu0 0.0
        %1409 = vmatmul.mubr.f32.gmra.mrb[0].mxu0 %v1325
        %v1410 = vpop.f32.mrb[0].mxu0
        %v1411 = vadd.f32 0.0, %v1410
        %v1412 = vpop.f32.mrb[0].mxu0
        %1413 = vmatprep.mubr.f32.mxu0 0.0
        %1414 = vmatmul.mubr.f32.gmra.mrb[0].mxu0 %v1326
        %v1415 = vpop.f32.mrb[0].mxu0
        %v1416 = vadd.f32 0.0, %v1415
        %v1417 = vpop.f32.mrb[0].mxu0
        %1418 = vdwg.mxu0
        %v1419 = vadd.f32 %v1317, %v1411
        %v1420 = vadd.f32 %v1322, %v1416
        %s1421 = scalar_lea.vmem [#allocation8], 3
        %v1422 = vld [vmem:[%s1421] sm:$0x1]
        %v1424 = vlaneseq
        %v1425 = vshrl.u32 %v1424, 7
        %v1426 = vsub.s32 0, %v1425
        %v1427 = vrot.slane %v1422, %v1426
        %v1429 = vadd.f32 %v1419, %v1427
        %v1430 = vadd.f32 %v1420, %v1427
        %v1431 = vadd.f32 %v825, %v1429
        %v1432 = vadd.f32 %v826, %v1430
        %vm1433 = vcmp.gt.f32.partialorder %v1431, 0.0
        %vm1434 = vcmp.gt.f32.partialorder %v1432, 0.0
        %v1435 = vmul.f32 %v1431, 0.1
        %v1436 = vmul.f32 %v1432, 0.1
        %v1437 = vsel %vm1433, %v1431, %v1435
        %v1438 = vsel %vm1434, %v1432, %v1436
        %1439 = vst [vmem:[#allocation2 + $0x5] sm:$0xff] %v1437
        %1440 = vst [vmem:[#allocation2 + $0xd] sm:$0xff] %v1438
        %v1441 = vld [vmem:[#allocation2] sm:$0xff]
        %v1442 = vld [vmem:[#allocation2 + $0x8] sm:$0xff]
        %s1443 = scalar_lea.vmem [#allocation6], 1536
        %v1444 = vld [vmem:[%s1443] sm:$0xff]
        %v1445 = vld [vmem:[%s1443 + $0x8] sm:$0xff]
        %v1446 = vld [vmem:[%s1443 + $0x10] sm:$0xff]
        %v1447 = vld [vmem:[%s1443 + $0x18] sm:$0xff]
        %v1448 = vld [vmem:[%s1443 + $0x20] sm:$0xff]
        %v1449 = vld [vmem:[%s1443 + $0x28] sm:$0xff]
        %v1450 = vld [vmem:[%s1443 + $0x30] sm:$0xff]
        %v1451 = vld [vmem:[%s1443 + $0x38] sm:$0xff]
        %v1452 = vld [vmem:[%s1443 + $0x40] sm:$0xff]
        %v1453 = vld [vmem:[%s1443 + $0x48] sm:$0xff]
        %v1454 = vld [vmem:[%s1443 + $0x50] sm:$0xff]
        %v1455 = vld [vmem:[%s1443 + $0x58] sm:$0xff]
        %v1456 = vld [vmem:[%s1443 + $0x60] sm:$0xff]
        %v1457 = vld [vmem:[%s1443 + $0x68] sm:$0xff]
        %v1458 = vld [vmem:[%s1443 + $0x70] sm:$0xff]
        %v1459 = vld [vmem:[%s1443 + $0x78] sm:$0xff]
        %v1460 = vld [vmem:[#allocation2 + $0x5] sm:$0xff]
        %v1461 = vld [vmem:[#allocation2 + $0xd] sm:$0xff]
        %s1462 = scalar_lea.vmem [#allocation6], 1664
        %v1463 = vld [vmem:[%s1462] sm:$0xff]
        %v1464 = vld [vmem:[%s1462 + $0x8] sm:$0xff]
        %v1465 = vld [vmem:[%s1462 + $0x10] sm:$0xff]
        %v1466 = vld [vmem:[%s1462 + $0x18] sm:$0xff]
        %v1467 = vld [vmem:[%s1462 + $0x20] sm:$0xff]
        %v1468 = vld [vmem:[%s1462 + $0x28] sm:$0xff]
        %v1469 = vld [vmem:[%s1462 + $0x30] sm:$0xff]
        %v1470 = vld [vmem:[%s1462 + $0x38] sm:$0xff]
        %v1471 = vld [vmem:[%s1462 + $0x40] sm:$0xff]
        %v1472 = vld [vmem:[%s1462 + $0x48] sm:$0xff]
        %v1473 = vld [vmem:[%s1462 + $0x50] sm:$0xff]
        %v1474 = vld [vmem:[%s1462 + $0x58] sm:$0xff]
        %v1475 = vld [vmem:[%s1462 + $0x60] sm:$0xff]
        %v1476 = vld [vmem:[%s1462 + $0x68] sm:$0xff]
        %v1477 = vld [vmem:[%s1462 + $0x70] sm:$0xff]
        %v1478 = vld [vmem:[%s1462 + $0x78] sm:$0xff]
        %1479 = vmatprep.subr.mxu0 0.0
        %1480 = vmatpush1.msra.mxu0 %v1463
        %1481 = vmatprep.subr.mxu0 0.0
        %1482 = vmatpush1.msra.mxu0 %v1464
        %1483 = vmatprep.subr.mxu0 0.0
        %1484 = vmatpush1.msra.mxu0 %v1465
        %1485 = vmatprep.subr.mxu0 0.0
        %1486 = vmatpush1.msra.mxu0 %v1466
        %1487 = vmatprep.subr.mxu0 0.0
        %1488 = vmatpush1.msra.mxu0 %v1467
        %1489 = vmatprep.subr.mxu0 0.0
        %1490 = vmatpush1.msra.mxu0 %v1468
        %1491 = vmatprep.subr.mxu0 0.0
        %1492 = vmatpush1.msra.mxu0 %v1469
        %1493 = vmatprep.subr.mxu0 0.0
        %1494 = vmatpush1.msra.mxu0 %v1470
        %1495 = vmatprep.subr.mxu0 0.0
        %1496 = vmatpush1.msra.mxu0 %v1471
        %1497 = vmatprep.subr.mxu0 0.0
        %1498 = vmatpush1.msra.mxu0 %v1472
        %1499 = vmatprep.subr.mxu0 0.0
        %1500 = vmatpush1.msra.mxu0 %v1473
        %1501 = vmatprep.subr.mxu0 0.0
        %1502 = vmatpush1.msra.mxu0 %v1474
        %1503 = vmatprep.subr.mxu0 0.0
        %1504 = vmatpush1.msra.mxu0 %v1475
        %1505 = vmatprep.subr.mxu0 0.0
        %1506 = vmatpush1.msra.mxu0 %v1476
        %1507 = vmatprep.subr.mxu0 0.0
        %1508 = vmatpush1.msra.mxu0 %v1477
        %1509 = vmatprep.subr.mxu0 0.0
        %1510 = vmatpush1.msra.mxu0 %v1478
        %1511 = vmatprep.subr.mxu0 0.0
        %1512 = vmatpush1.msra.mxu0 0.0
        %1513 = vmatprep.subr.mxu0 0.0
        %1514 = vmatpush1.msra.mxu0 0.0
        %1515 = vmatprep.subr.mxu0 0.0
        %1516 = vmatpush1.msra.mxu0 0.0
        %1517 = vmatprep.subr.mxu0 0.0
        %1518 = vmatpush1.msra.mxu0 0.0
        %1519 = vmatprep.subr.mxu0 0.0
        %1520 = vmatpush1.msra.mxu0 0.0
        %1521 = vmatprep.subr.mxu0 0.0
        %1522 = vmatpush1.msra.mxu0 0.0
        %1523 = vmatprep.subr.mxu0 0.0
        %1524 = vmatpush1.msra.mxu0 0.0
        %1525 = vmatprep.subr.mxu0 0.0
        %1526 = vmatpush1.msra.mxu0 0.0
        %1527 = vmatprep.subr.mxu0 0.0
        %1528 = vmatpush1.msra.mxu0 0.0
        %1529 = vmatprep.subr.mxu0 0.0
        %1530 = vmatpush1.msra.mxu0 0.0
        %1531 = vmatprep.subr.mxu0 0.0
        %1532 = vmatpush1.msra.mxu0 0.0
        %1533 = vmatprep.subr.mxu0 0.0
        %1534 = vmatpush1.msra.mxu0 0.0
        %1535 = vmatprep.subr.mxu0 0.0
        %1536 = vmatpush1.msra.mxu0 0.0
        %1537 = vmatprep.subr.mxu0 0.0
        %1538 = vmatpush1.msra.mxu0 0.0
        %1539 = vmatprep.subr.mxu0 0.0
        %1540 = vmatpush1.msra.mxu0 0.0
        %1541 = vmatprep.subr.mxu0 0.0
        %1542 = vmatpush1.msra.mxu0 0.0
        %1543 = vmatprep.mubr.f32.mxu0 0.0
        %1544 = vmatmul.mubr.f32.gmra.mrb[0].mxu0 %v1460
        %v1545 = vpop.f32.mrb[0].mxu0
        %v1546 = vadd.f32 0.0, %v1545
        %v1547 = vpop.f32.mrb[0].mxu0
        %1548 = vmatprep.mubr.f32.mxu0 0.0
        %1549 = vmatmul.mubr.f32.gmra.mrb[0].mxu0 %v1461
        %v1550 = vpop.f32.mrb[0].mxu0
        %v1551 = vadd.f32 0.0, %v1550
        %v1552 = vpop.f32.mrb[0].mxu0
        %1553 = vdwg.mxu0
        %1554 = vmatprep.subr.mxu0 0.0
        %1555 = vmatpush1.msra.mxu0 %v1444
        %1556 = vmatprep.subr.mxu0 0.0
        %1557 = vmatpush1.msra.mxu0 %v1445
        %1558 = vmatprep.subr.mxu0 0.0
        %1559 = vmatpush1.msra.mxu0 %v1446
        %1560 = vmatprep.subr.mxu0 0.0
        %1561 = vmatpush1.msra.mxu0 %v1447
        %1562 = vmatprep.subr.mxu0 0.0
        %1563 = vmatpush1.msra.mxu0 %v1448
        %1564 = vmatprep.subr.mxu0 0.0
        %1565 = vmatpush1.msra.mxu0 %v1449
        %1566 = vmatprep.subr.mxu0 0.0
        %1567 = vmatpush1.msra.mxu0 %v1450
        %1568 = vmatprep.subr.mxu0 0.0
        %1569 = vmatpush1.msra.mxu0 %v1451
        %1570 = vmatprep.subr.mxu0 0.0
        %1571 = vmatpush1.msra.mxu0 %v1452
        %1572 = vmatprep.subr.mxu0 0.0
        %1573 = vmatpush1.msra.mxu0 %v1453
        %1574 = vmatprep.subr.mxu0 0.0
        %1575 = vmatpush1.msra.mxu0 %v1454
        %1576 = vmatprep.subr.mxu0 0.0
        %1577 = vmatpush1.msra.mxu0 %v1455
        %1578 = vmatprep.subr.mxu0 0.0
        %1579 = vmatpush1.msra.mxu0 %v1456
        %1580 = vmatprep.subr.mxu0 0.0
        %1581 = vmatpush1.msra.mxu0 %v1457
        %1582 = vmatprep.subr.mxu0 0.0
        %1583 = vmatpush1.msra.mxu0 %v1458
        %1584 = vmatprep.subr.mxu0 0.0
        %1585 = vmatpush1.msra.mxu0 %v1459
        %1586 = vmatprep.subr.mxu0 0.0
        %1587 = vmatpush1.msra.mxu0 0.0
        %1588 = vmatprep.subr.mxu0 0.0
        %1589 = vmatpush1.msra.mxu0 0.0
        %1590 = vmatprep.subr.mxu0 0.0
        %1591 = vmatpush1.msra.mxu0 0.0
        %1592 = vmatprep.subr.mxu0 0.0
        %1593 = vmatpush1.msra.mxu0 0.0
        %1594 = vmatprep.subr.mxu0 0.0
        %1595 = vmatpush1.msra.mxu0 0.0
        %1596 = vmatprep.subr.mxu0 0.0
        %1597 = vmatpush1.msra.mxu0 0.0
        %1598 = vmatprep.subr.mxu0 0.0
        %1599 = vmatpush1.msra.mxu0 0.0
        %1600 = vmatprep.subr.mxu0 0.0
        %1601 = vmatpush1.msra.mxu0 0.0
        %1602 = vmatprep.subr.mxu0 0.0
        %1603 = vmatpush1.msra.mxu0 0.0
        %1604 = vmatprep.subr.mxu0 0.0
        %1605 = vmatpush1.msra.mxu0 0.0
        %1606 = vmatprep.subr.mxu0 0.0
        %1607 = vmatpush1.msra.mxu0 0.0
        %1608 = vmatprep.subr.mxu0 0.0
        %1609 = vmatpush1.msra.mxu0 0.0
        %1610 = vmatprep.subr.mxu0 0.0
        %1611 = vmatpush1.msra.mxu0 0.0
        %1612 = vmatprep.subr.mxu0 0.0
        %1613 = vmatpush1.msra.mxu0 0.0
        %1614 = vmatprep.subr.mxu0 0.0
        %1615 = vmatpush1.msra.mxu0 0.0
        %1616 = vmatprep.subr.mxu0 0.0
        %1617 = vmatpush1.msra.mxu0 0.0
        %1618 = vmatprep.mubr.f32.mxu0 0.0
        %1619 = vmatmul.mubr.f32.gmra.mrb[0].mxu0 %v1441
        %v1620 = vpop.f32.mrb[0].mxu0
        %v1621 = vadd.f32 %v1546, %v1620
        %v1622 = vpop.f32.mrb[0].mxu0
        %1623 = vmatprep.mubr.f32.mxu0 0.0
        %1624 = vmatmul.mubr.f32.gmra.mrb[0].mxu0 %v1442
        %v1625 = vpop.f32.mrb[0].mxu0
        %v1626 = vadd.f32 %v1551, %v1625
        %v1627 = vpop.f32.mrb[0].mxu0
        %1628 = vdwg.mxu0
        %v1629 = vld [vmem:[#allocation2 + $0xa] sm:$0xff]
        %v1630 = vld [vmem:[#allocation2 + $0x12] sm:$0xff]
        %s1631 = scalar_lea.vmem [#allocation6], 1792
        %v1632 = vld [vmem:[%s1631] sm:$0xff]
        %v1633 = vld [vmem:[%s1631 + $0x8] sm:$0xff]
        %v1634 = vld [vmem:[%s1631 + $0x10] sm:$0xff]
        %v1635 = vld [vmem:[%s1631 + $0x18] sm:$0xff]
        %v1636 = vld [vmem:[%s1631 + $0x20] sm:$0xff]
        %v1637 = vld [vmem:[%s1631 + $0x28] sm:$0xff]
        %v1638 = vld [vmem:[%s1631 + $0x30] sm:$0xff]
        %v1639 = vld [vmem:[%s1631 + $0x38] sm:$0xff]
        %v1640 = vld [vmem:[%s1631 + $0x40] sm:$0xff]
        %v1641 = vld [vmem:[%s1631 + $0x48] sm:$0xff]
        %v1642 = vld [vmem:[%s1631 + $0x50] sm:$0xff]
        %v1643 = vld [vmem:[%s1631 + $0x58] sm:$0xff]
        %v1644 = vld [vmem:[%s1631 + $0x60] sm:$0xff]
        %v1645 = vld [vmem:[%s1631 + $0x68] sm:$0xff]
        %v1646 = vld [vmem:[%s1631 + $0x70] sm:$0xff]
        %v1647 = vld [vmem:[%s1631 + $0x78] sm:$0xff]
        %1648 = vmatprep.subr.mxu0 0.0
        %1649 = vmatpush1.msra.mxu0 %v1632
        %1650 = vmatprep.subr.mxu0 0.0
        %1651 = vmatpush1.msra.mxu0 %v1633
        %1652 = vmatprep.subr.mxu0 0.0
        %1653 = vmatpush1.msra.mxu0 %v1634
        %1654 = vmatprep.subr.mxu0 0.0
        %1655 = vmatpush1.msra.mxu0 %v1635
        %1656 = vmatprep.subr.mxu0 0.0
        %1657 = vmatpush1.msra.mxu0 %v1636
        %1658 = vmatprep.subr.mxu0 0.0
        %1659 = vmatpush1.msra.mxu0 %v1637
        %1660 = vmatprep.subr.mxu0 0.0
        %1661 = vmatpush1.msra.mxu0 %v1638
        %1662 = vmatprep.subr.mxu0 0.0
        %1663 = vmatpush1.msra.mxu0 %v1639
        %1664 = vmatprep.subr.mxu0 0.0
        %1665 = vmatpush1.msra.mxu0 %v1640
        %1666 = vmatprep.subr.mxu0 0.0
        %1667 = vmatpush1.msra.mxu0 %v1641
        %1668 = vmatprep.subr.mxu0 0.0
        %1669 = vmatpush1.msra.mxu0 %v1642
        %1670 = vmatprep.subr.mxu0 0.0
        %1671 = vmatpush1.msra.mxu0 %v1643
        %1672 = vmatprep.subr.mxu0 0.0
        %1673 = vmatpush1.msra.mxu0 %v1644
        %1674 = vmatprep.subr.mxu0 0.0
        %1675 = vmatpush1.msra.mxu0 %v1645
        %1676 = vmatprep.subr.mxu0 0.0
        %1677 = vmatpush1.msra.mxu0 %v1646
        %1678 = vmatprep.subr.mxu0 0.0
        %1679 = vmatpush1.msra.mxu0 %v1647
        %1680 = vmatprep.subr.mxu0 0.0
        %1681 = vmatpush1.msra.mxu0 0.0
        %1682 = vmatprep.subr.mxu0 0.0
        %1683 = vmatpush1.msra.mxu0 0.0
        %1684 = vmatprep.subr.mxu0 0.0
        %1685 = vmatpush1.msra.mxu0 0.0
        %1686 = vmatprep.subr.mxu0 0.0
        %1687 = vmatpush1.msra.mxu0 0.0
        %1688 = vmatprep.subr.mxu0 0.0
        %1689 = vmatpush1.msra.mxu0 0.0
        %1690 = vmatprep.subr.mxu0 0.0
        %1691 = vmatpush1.msra.mxu0 0.0
        %1692 = vmatprep.subr.mxu0 0.0
        %1693 = vmatpush1.msra.mxu0 0.0
        %1694 = vmatprep.subr.mxu0 0.0
        %1695 = vmatpush1.msra.mxu0 0.0
        %1696 = vmatprep.subr.mxu0 0.0
        %1697 = vmatpush1.msra.mxu0 0.0
        %1698 = vmatprep.subr.mxu0 0.0
        %1699 = vmatpush1.msra.mxu0 0.0
        %1700 = vmatprep.subr.mxu0 0.0
        %1701 = vmatpush1.msra.mxu0 0.0
        %1702 = vmatprep.subr.mxu0 0.0
        %1703 = vmatpush1.msra.mxu0 0.0
        %1704 = vmatprep.subr.mxu0 0.0
        %1705 = vmatpush1.msra.mxu0 0.0
        %1706 = vmatprep.subr.mxu0 0.0
        %1707 = vmatpush1.msra.mxu0 0.0
        %1708 = vmatprep.subr.mxu0 0.0
        %1709 = vmatpush1.msra.mxu0 0.0
        %1710 = vmatprep.subr.mxu0 0.0
        %1711 = vmatpush1.msra.mxu0 0.0
        %1712 = vmatprep.mubr.f32.mxu0 0.0
        %1713 = vmatmul.mubr.f32.gmra.mrb[0].mxu0 %v1629
        %v1714 = vpop.f32.mrb[0].mxu0
        %v1715 = vadd.f32 0.0, %v1714
        %v1716 = vpop.f32.mrb[0].mxu0
        %1717 = vmatprep.mubr.f32.mxu0 0.0
        %1718 = vmatmul.mubr.f32.gmra.mrb[0].mxu0 %v1630
        %v1719 = vpop.f32.mrb[0].mxu0
        %v1720 = vadd.f32 0.0, %v1719
        %v1721 = vpop.f32.mrb[0].mxu0
        %1722 = vdwg.mxu0
        %v1723 = vadd.f32 %v1621, %v1715
        %v1724 = vadd.f32 %v1626, %v1720
        %s1725 = scalar_lea.vmem [#allocation8], 4
        %v1726 = vld [vmem:[%s1725] sm:$0x1]
        %v1728 = vlaneseq
        %v1729 = vshrl.u32 %v1728, 7
        %v1730 = vsub.s32 0, %v1729
        %v1731 = vrot.slane %v1726, %v1730
        %v1733 = vadd.f32 %v1723, %v1731
        %v1734 = vadd.f32 %v1724, %v1731
        %vm1735 = vcmp.gt.f32.partialorder %v1733, 0.0
        %vm1736 = vcmp.gt.f32.partialorder %v1734, 0.0
        %v1737 = vmul.f32 %v1733, 0.1
        %v1738 = vmul.f32 %v1734, 0.1
        %v1739 = vsel %vm1735, %v1733, %v1737
        %v1740 = vsel %vm1736, %v1734, %v1738
        %1741 = vst [vmem:[#allocation2 + $0x5] sm:$0xff] %v1739
        %1742 = vst [vmem:[#allocation2 + $0xd] sm:$0xff] %v1740
        %v1743 = vld [vmem:[#allocation2 + $0x4] sm:$0xff]
        %v1744 = vld [vmem:[#allocation2 + $0xc] sm:$0xff]
        %s1745 = scalar_lea.vmem [#allocation6], 1920
        %v1746 = vld [vmem:[%s1745] sm:$0xff]
        %v1747 = vld [vmem:[%s1745 + $0x8] sm:$0xff]
        %v1748 = vld [vmem:[%s1745 + $0x10] sm:$0xff]
        %v1749 = vld [vmem:[%s1745 + $0x18] sm:$0xff]
        %v1750 = vld [vmem:[%s1745 + $0x20] sm:$0xff]
        %v1751 = vld [vmem:[%s1745 + $0x28] sm:$0xff]
        %v1752 = vld [vmem:[%s1745 + $0x30] sm:$0xff]
        %v1753 = vld [vmem:[%s1745 + $0x38] sm:$0xff]
        %v1754 = vld [vmem:[%s1745 + $0x40] sm:$0xff]
        %v1755 = vld [vmem:[%s1745 + $0x48] sm:$0xff]
        %v1756 = vld [vmem:[%s1745 + $0x50] sm:$0xff]
        %v1757 = vld [vmem:[%s1745 + $0x58] sm:$0xff]
        %v1758 = vld [vmem:[%s1745 + $0x60] sm:$0xff]
        %v1759 = vld [vmem:[%s1745 + $0x68] sm:$0xff]
        %v1760 = vld [vmem:[%s1745 + $0x70] sm:$0xff]
        %v1761 = vld [vmem:[%s1745 + $0x78] sm:$0xff]
        %v1762 = vld [vmem:[#allocation2 + $0x5] sm:$0xff]
        %v1763 = vld [vmem:[#allocation2 + $0xd] sm:$0xff]
        %s1764 = scalar_lea.vmem [#allocation6], 2048
        %v1765 = vld [vmem:[%s1764] sm:$0xff]
        %v1766 = vld [vmem:[%s1764 + $0x8] sm:$0xff]
        %v1767 = vld [vmem:[%s1764 + $0x10] sm:$0xff]
        %v1768 = vld [vmem:[%s1764 + $0x18] sm:$0xff]
        %v1769 = vld [vmem:[%s1764 + $0x20] sm:$0xff]
        %v1770 = vld [vmem:[%s1764 + $0x28] sm:$0xff]
        %v1771 = vld [vmem:[%s1764 + $0x30] sm:$0xff]
        %v1772 = vld [vmem:[%s1764 + $0x38] sm:$0xff]
        %v1773 = vld [vmem:[%s1764 + $0x40] sm:$0xff]
        %v1774 = vld [vmem:[%s1764 + $0x48] sm:$0xff]
        %v1775 = vld [vmem:[%s1764 + $0x50] sm:$0xff]
        %v1776 = vld [vmem:[%s1764 + $0x58] sm:$0xff]
        %v1777 = vld [vmem:[%s1764 + $0x60] sm:$0xff]
        %v1778 = vld [vmem:[%s1764 + $0x68] sm:$0xff]
        %v1779 = vld [vmem:[%s1764 + $0x70] sm:$0xff]
        %v1780 = vld [vmem:[%s1764 + $0x78] sm:$0xff]
        %1781 = vmatprep.subr.mxu0 0.0
        %1782 = vmatpush1.msra.mxu0 %v1765
        %1783 = vmatprep.subr.mxu0 0.0
        %1784 = vmatpush1.msra.mxu0 %v1766
        %1785 = vmatprep.subr.mxu0 0.0
        %1786 = vmatpush1.msra.mxu0 %v1767
        %1787 = vmatprep.subr.mxu0 0.0
        %1788 = vmatpush1.msra.mxu0 %v1768
        %1789 = vmatprep.subr.mxu0 0.0
        %1790 = vmatpush1.msra.mxu0 %v1769
        %1791 = vmatprep.subr.mxu0 0.0
        %1792 = vmatpush1.msra.mxu0 %v1770
        %1793 = vmatprep.subr.mxu0 0.0
        %1794 = vmatpush1.msra.mxu0 %v1771
        %1795 = vmatprep.subr.mxu0 0.0
        %1796 = vmatpush1.msra.mxu0 %v1772
        %1797 = vmatprep.subr.mxu0 0.0
        %1798 = vmatpush1.msra.mxu0 %v1773
        %1799 = vmatprep.subr.mxu0 0.0
        %1800 = vmatpush1.msra.mxu0 %v1774
        %1801 = vmatprep.subr.mxu0 0.0
        %1802 = vmatpush1.msra.mxu0 %v1775
        %1803 = vmatprep.subr.mxu0 0.0
        %1804 = vmatpush1.msra.mxu0 %v1776
        %1805 = vmatprep.subr.mxu0 0.0
        %1806 = vmatpush1.msra.mxu0 %v1777
        %1807 = vmatprep.subr.mxu0 0.0
        %1808 = vmatpush1.msra.mxu0 %v1778
        %1809 = vmatprep.subr.mxu0 0.0
        %1810 = vmatpush1.msra.mxu0 %v1779
        %1811 = vmatprep.subr.mxu0 0.0
        %1812 = vmatpush1.msra.mxu0 %v1780
        %1813 = vmatprep.subr.mxu0 0.0
        %1814 = vmatpush1.msra.mxu0 0.0
        %1815 = vmatprep.subr.mxu0 0.0
        %1816 = vmatpush1.msra.mxu0 0.0
        %1817 = vmatprep.subr.mxu0 0.0
        %1818 = vmatpush1.msra.mxu0 0.0
        %1819 = vmatprep.subr.mxu0 0.0
        %1820 = vmatpush1.msra.mxu0 0.0
        %1821 = vmatprep.subr.mxu0 0.0
        %1822 = vmatpush1.msra.mxu0 0.0
        %1823 = vmatprep.subr.mxu0 0.0
        %1824 = vmatpush1.msra.mxu0 0.0
        %1825 = vmatprep.subr.mxu0 0.0
        %1826 = vmatpush1.msra.mxu0 0.0
        %1827 = vmatprep.subr.mxu0 0.0
        %1828 = vmatpush1.msra.mxu0 0.0
        %1829 = vmatprep.subr.mxu0 0.0
        %1830 = vmatpush1.msra.mxu0 0.0
        %1831 = vmatprep.subr.mxu0 0.0
        %1832 = vmatpush1.msra.mxu0 0.0
        %1833 = vmatprep.subr.mxu0 0.0
        %1834 = vmatpush1.msra.mxu0 0.0
        %1835 = vmatprep.subr.mxu0 0.0
        %1836 = vmatpush1.msra.mxu0 0.0
        %1837 = vmatprep.subr.mxu0 0.0
        %1838 = vmatpush1.msra.mxu0 0.0
        %1839 = vmatprep.subr.mxu0 0.0
        %1840 = vmatpush1.msra.mxu0 0.0
        %1841 = vmatprep.subr.mxu0 0.0
        %1842 = vmatpush1.msra.mxu0 0.0
        %1843 = vmatprep.subr.mxu0 0.0
        %1844 = vmatpush1.msra.mxu0 0.0
        %1845 = vmatprep.mubr.f32.mxu0 0.0
        %1846 = vmatmul.mubr.f32.gmra.mrb[0].mxu0 %v1762
        %v1847 = vpop.f32.mrb[0].mxu0
        %v1848 = vadd.f32 0.0, %v1847
        %v1849 = vpop.f32.mrb[0].mxu0
        %1850 = vmatprep.mubr.f32.mxu0 0.0
        %1851 = vmatmul.mubr.f32.gmra.mrb[0].mxu0 %v1763
        %v1852 = vpop.f32.mrb[0].mxu0
        %v1853 = vadd.f32 0.0, %v1852
        %v1854 = vpop.f32.mrb[0].mxu0
        %1855 = vdwg.mxu0
        %1856 = vmatprep.subr.mxu0 0.0
        %1857 = vmatpush1.msra.mxu0 %v1746
        %1858 = vmatprep.subr.mxu0 0.0
        %1859 = vmatpush1.msra.mxu0 %v1747
        %1860 = vmatprep.subr.mxu0 0.0
        %1861 = vmatpush1.msra.mxu0 %v1748
        %1862 = vmatprep.subr.mxu0 0.0
        %1863 = vmatpush1.msra.mxu0 %v1749
        %1864 = vmatprep.subr.mxu0 0.0
        %1865 = vmatpush1.msra.mxu0 %v1750
        %1866 = vmatprep.subr.mxu0 0.0
        %1867 = vmatpush1.msra.mxu0 %v1751
        %1868 = vmatprep.subr.mxu0 0.0
        %1869 = vmatpush1.msra.mxu0 %v1752
        %1870 = vmatprep.subr.mxu0 0.0
        %1871 = vmatpush1.msra.mxu0 %v1753
        %1872 = vmatprep.subr.mxu0 0.0
        %1873 = vmatpush1.msra.mxu0 %v1754
        %1874 = vmatprep.subr.mxu0 0.0
        %1875 = vmatpush1.msra.mxu0 %v1755
        %1876 = vmatprep.subr.mxu0 0.0
        %1877 = vmatpush1.msra.mxu0 %v1756
        %1878 = vmatprep.subr.mxu0 0.0
        %1879 = vmatpush1.msra.mxu0 %v1757
        %1880 = vmatprep.subr.mxu0 0.0
        %1881 = vmatpush1.msra.mxu0 %v1758
        %1882 = vmatprep.subr.mxu0 0.0
        %1883 = vmatpush1.msra.mxu0 %v1759
        %1884 = vmatprep.subr.mxu0 0.0
        %1885 = vmatpush1.msra.mxu0 %v1760
        %1886 = vmatprep.subr.mxu0 0.0
        %1887 = vmatpush1.msra.mxu0 %v1761
        %1888 = vmatprep.subr.mxu0 0.0
        %1889 = vmatpush1.msra.mxu0 0.0
        %1890 = vmatprep.subr.mxu0 0.0
        %1891 = vmatpush1.msra.mxu0 0.0
        %1892 = vmatprep.subr.mxu0 0.0
        %1893 = vmatpush1.msra.mxu0 0.0
        %1894 = vmatprep.subr.mxu0 0.0
        %1895 = vmatpush1.msra.mxu0 0.0
        %1896 = vmatprep.subr.mxu0 0.0
        %1897 = vmatpush1.msra.mxu0 0.0
        %1898 = vmatprep.subr.mxu0 0.0
        %1899 = vmatpush1.msra.mxu0 0.0
        %1900 = vmatprep.subr.mxu0 0.0
        %1901 = vmatpush1.msra.mxu0 0.0
        %1902 = vmatprep.subr.mxu0 0.0
        %1903 = vmatpush1.msra.mxu0 0.0
        %1904 = vmatprep.subr.mxu0 0.0
        %1905 = vmatpush1.msra.mxu0 0.0
        %1906 = vmatprep.subr.mxu0 0.0
        %1907 = vmatpush1.msra.mxu0 0.0
        %1908 = vmatprep.subr.mxu0 0.0
        %1909 = vmatpush1.msra.mxu0 0.0
        %1910 = vmatprep.subr.mxu0 0.0
        %1911 = vmatpush1.msra.mxu0 0.0
        %1912 = vmatprep.subr.mxu0 0.0
        %1913 = vmatpush1.msra.mxu0 0.0
        %1914 = vmatprep.subr.mxu0 0.0
        %1915 = vmatpush1.msra.mxu0 0.0
        %1916 = vmatprep.subr.mxu0 0.0
        %1917 = vmatpush1.msra.mxu0 0.0
        %1918 = vmatprep.subr.mxu0 0.0
        %1919 = vmatpush1.msra.mxu0 0.0
        %1920 = vmatprep.mubr.f32.mxu0 0.0
        %1921 = vmatmul.mubr.f32.gmra.mrb[0].mxu0 %v1743
        %v1922 = vpop.f32.mrb[0].mxu0
        %v1923 = vadd.f32 %v1848, %v1922
        %v1924 = vpop.f32.mrb[0].mxu0
        %1925 = vmatprep.mubr.f32.mxu0 0.0
        %1926 = vmatmul.mubr.f32.gmra.mrb[0].mxu0 %v1744
        %v1927 = vpop.f32.mrb[0].mxu0
        %v1928 = vadd.f32 %v1853, %v1927
        %v1929 = vpop.f32.mrb[0].mxu0
        %1930 = vdwg.mxu0
        %v1931 = vld [vmem:[#allocation2 + $0x6] sm:$0xff]
        %v1932 = vld [vmem:[#allocation2 + $0xe] sm:$0xff]
        %s1933 = scalar_lea.vmem [#allocation6], 2176
        %v1934 = vld [vmem:[%s1933] sm:$0xff]
        %v1935 = vld [vmem:[%s1933 + $0x8] sm:$0xff]
        %v1936 = vld [vmem:[%s1933 + $0x10] sm:$0xff]
        %v1937 = vld [vmem:[%s1933 + $0x18] sm:$0xff]
        %v1938 = vld [vmem:[%s1933 + $0x20] sm:$0xff]
        %v1939 = vld [vmem:[%s1933 + $0x28] sm:$0xff]
        %v1940 = vld [vmem:[%s1933 + $0x30] sm:$0xff]
        %v1941 = vld [vmem:[%s1933 + $0x38] sm:$0xff]
        %v1942 = vld [vmem:[%s1933 + $0x40] sm:$0xff]
        %v1943 = vld [vmem:[%s1933 + $0x48] sm:$0xff]
        %v1944 = vld [vmem:[%s1933 + $0x50] sm:$0xff]
        %v1945 = vld [vmem:[%s1933 + $0x58] sm:$0xff]
        %v1946 = vld [vmem:[%s1933 + $0x60] sm:$0xff]
        %v1947 = vld [vmem:[%s1933 + $0x68] sm:$0xff]
        %v1948 = vld [vmem:[%s1933 + $0x70] sm:$0xff]
        %v1949 = vld [vmem:[%s1933 + $0x78] sm:$0xff]
        %1950 = vmatprep.subr.mxu0 0.0
        %1951 = vmatpush1.msra.mxu0 %v1934
        %1952 = vmatprep.subr.mxu0 0.0
        %1953 = vmatpush1.msra.mxu0 %v1935
        %1954 = vmatprep.subr.mxu0 0.0
        %1955 = vmatpush1.msra.mxu0 %v1936
        %1956 = vmatprep.subr.mxu0 0.0
        %1957 = vmatpush1.msra.mxu0 %v1937
        %1958 = vmatprep.subr.mxu0 0.0
        %1959 = vmatpush1.msra.mxu0 %v1938
        %1960 = vmatprep.subr.mxu0 0.0
        %1961 = vmatpush1.msra.mxu0 %v1939
        %1962 = vmatprep.subr.mxu0 0.0
        %1963 = vmatpush1.msra.mxu0 %v1940
        %1964 = vmatprep.subr.mxu0 0.0
        %1965 = vmatpush1.msra.mxu0 %v1941
        %1966 = vmatprep.subr.mxu0 0.0
        %1967 = vmatpush1.msra.mxu0 %v1942
        %1968 = vmatprep.subr.mxu0 0.0
        %1969 = vmatpush1.msra.mxu0 %v1943
        %1970 = vmatprep.subr.mxu0 0.0
        %1971 = vmatpush1.msra.mxu0 %v1944
        %1972 = vmatprep.subr.mxu0 0.0
        %1973 = vmatpush1.msra.mxu0 %v1945
        %1974 = vmatprep.subr.mxu0 0.0
        %1975 = vmatpush1.msra.mxu0 %v1946
        %1976 = vmatprep.subr.mxu0 0.0
        %1977 = vmatpush1.msra.mxu0 %v1947
        %1978 = vmatprep.subr.mxu0 0.0
        %1979 = vmatpush1.msra.mxu0 %v1948
        %1980 = vmatprep.subr.mxu0 0.0
        %1981 = vmatpush1.msra.mxu0 %v1949
        %1982 = vmatprep.subr.mxu0 0.0
        %1983 = vmatpush1.msra.mxu0 0.0
        %1984 = vmatprep.subr.mxu0 0.0
        %1985 = vmatpush1.msra.mxu0 0.0
        %1986 = vmatprep.subr.mxu0 0.0
        %1987 = vmatpush1.msra.mxu0 0.0
        %1988 = vmatprep.subr.mxu0 0.0
        %1989 = vmatpush1.msra.mxu0 0.0
        %1990 = vmatprep.subr.mxu0 0.0
        %1991 = vmatpush1.msra.mxu0 0.0
        %1992 = vmatprep.subr.mxu0 0.0
        %1993 = vmatpush1.msra.mxu0 0.0
        %1994 = vmatprep.subr.mxu0 0.0
        %1995 = vmatpush1.msra.mxu0 0.0
        %1996 = vmatprep.subr.mxu0 0.0
        %1997 = vmatpush1.msra.mxu0 0.0
        %1998 = vmatprep.subr.mxu0 0.0
        %1999 = vmatpush1.msra.mxu0 0.0
        %2000 = vmatprep.subr.mxu0 0.0
        %2001 = vmatpush1.msra.mxu0 0.0
        %2002 = vmatprep.subr.mxu0 0.0
        %2003 = vmatpush1.msra.mxu0 0.0
        %2004 = vmatprep.subr.mxu0 0.0
        %2005 = vmatpush1.msra.mxu0 0.0
        %2006 = vmatprep.subr.mxu0 0.0
        %2007 = vmatpush1.msra.mxu0 0.0
        %2008 = vmatprep.subr.mxu0 0.0
        %2009 = vmatpush1.msra.mxu0 0.0
        %2010 = vmatprep.subr.mxu0 0.0
        %2011 = vmatpush1.msra.mxu0 0.0
        %2012 = vmatprep.subr.mxu0 0.0
        %2013 = vmatpush1.msra.mxu0 0.0
        %2014 = vmatprep.mubr.f32.mxu0 0.0
        %2015 = vmatmul.mubr.f32.gmra.mrb[0].mxu0 %v1931
        %v2016 = vpop.f32.mrb[0].mxu0
        %v2017 = vadd.f32 0.0, %v2016
        %v2018 = vpop.f32.mrb[0].mxu0
        %2019 = vmatprep.mubr.f32.mxu0 0.0
        %2020 = vmatmul.mubr.f32.gmra.mrb[0].mxu0 %v1932
        %v2021 = vpop.f32.mrb[0].mxu0
        %v2022 = vadd.f32 0.0, %v2021
        %v2023 = vpop.f32.mrb[0].mxu0
        %2024 = vdwg.mxu0
        %v2025 = vadd.f32 %v1923, %v2017
        %v2026 = vadd.f32 %v1928, %v2022
        %s2027 = scalar_lea.vmem [#allocation8], 5
        %v2028 = vld [vmem:[%s2027] sm:$0x1]
        %v2030 = vlaneseq
        %v2031 = vshrl.u32 %v2030, 7
        %v2032 = vsub.s32 0, %v2031
        %v2033 = vrot.slane %v2028, %v2032
        %v2035 = vadd.f32 %v2025, %v2033
        %v2036 = vadd.f32 %v2026, %v2033
        %v2037 = vadd.f32 %v1431, %v2035
        %v2038 = vadd.f32 %v1432, %v2036
        %2039 = vst [vmem:[%s217] sm:$0xff] %v2037
        %2040 = vst [vmem:[%s217 + $0x8] sm:$0xff] %v2038
        %s2041 = sand.u32 %s97, 1
        %s2042 = scalar_lea.sflag [#allocation5], %s2041
        %s2043 = sand.u32 %s97, 1
        %s2044 = smul.addr %s2043, 16
        %s2045 = scalar_lea.vmem [#allocation9], %s2044
        // Predicated region
        $region45: #{tpu_custom_call.1} parent=31 // pred_check
          %p2046 = pneg %p107
        $region46: #{tpu_custom_call.1} parent=31 // pred_check_branch
          %2048 = sbr.rel (%p2046) target = $region48
        $region47: #{tpu_custom_call.1} parent=31 // pred_region
          %s2050 = ssub.s32 256, 256
          %2051 = vsyncadd %s2042, %s2050
          %s2052 = smul.addr %s21, 2
          %s2053 = smul.addr %s2052, 128
          %s2054 = scalar_lea.hbm %s3, %s2053
          %s2055 = sshll.u32 %s2045, 4
          %s2056 = int_to_ptr.vmem [resolvable:$true] %s2055
          %2061 = dma.vmem_to_hbm [thread:$0]  %s2056, 256, %s2054, %s2042, 128, 128, 8
        $region48: #{tpu_custom_call.1} parent=31 // pred_fallthru
          _
      $region32: #{tpu_custom_call.1} parent=5 // pred_fallthru
        _
      %p2062 = scmp.le.s32.totalorder 2, %s16
      // Predicated region
      $region49: #{tpu_custom_call.1} parent=5 // pred_check
        %p2063 = pneg %p2062
      $region50: #{tpu_custom_call.1} parent=5 // pred_check_branch
        %2065 = sbr.rel (%p2063) target = $region52
      $region51: #{tpu_custom_call.1} parent=5 // pred_region
        %s2066 = ssub.s32 %s16, 2
        // Predicated region
        $region53: #{tpu_custom_call.1} parent=51 // pred_check
          %p2067 = pneg %p113
        $region54: #{tpu_custom_call.1} parent=51 // pred_check_branch
          %2069 = sbr.rel (%p2067) target = $region56
        $region55: #{tpu_custom_call.1} parent=51 // pred_region
          %s2070 = sand.u32 %s98, 1
          %s2071 = scalar_lea.sflag [#allocation5], %s2070
          %s2072 = sand.u32 %s98, 1
          %s2073 = smul.addr %s2072, 16
          %s2074 = scalar_lea.vmem [#allocation9], %s2073
          %2075 = dma.done %s2071, 256
        $region56: #{tpu_custom_call.1} parent=51 // pred_fallthru
          _
      $region52: #{tpu_custom_call.1} parent=5 // pred_fallthru
        _
    $region6: #{tpu_custom_call.1} parent=1 // loop_footer
      %s20 = sadd.s32 1, %s16
    $region7: #{tpu_custom_call.1} parent=1 // loop_footer_branch
      %15 = sbr.rel target = $region3
    $region8: #{tpu_custom_call.1} parent=1 // loop_exit
      _
    %2076 = vsyncpa [#allocation4], 1
    %s2077 = scalar_lea.sflag [#allocation4], 1
    %2078 = vsyncpa %s2077, 1
    %2079 = vsyncpa [#allocation7], 1
    %2080 = vsyncpa [#allocation5], 1
    %s2081 = scalar_lea.sflag [#allocation5], 1
    %2082 = vsyncpa %s2081, 1

</llo_original>
